<compile_context>
chip_gen: v7x
topology: tpu7x:2x2x1
jax: 0.10.0
libtpu: 0.0.40
codegen_flags: <defaults>
</compile_context>

<pallas_src>
import math

import jax
import jax.numpy as jnp
from jax.experimental import pallas as pl
from jax.experimental.pallas import tpu as pltpu

# ---- small, deterministic config (DiffusionConfig fields used by Denoiser) ----
B = 2          # batch
N_MEL = 8      # n_mel_channels               (M)
D_ENC = 16     # encoder_hidden               (E) -> conditioner channels
D_SPK = 16     # speaker_embed_dim            (S)
C = 32         # residual_channels
L = 4          # residual_layers
T = 16         # number of frames
BT = B * T     # batch stacked along sublanes

SQRT2 = math.sqrt(2.0)
SQRT_L = math.sqrt(float(L))

# ---- packed-weight slab layout (all offsets are 128-lane aligned) ----
# W_front [M+E, 256]   : rows 0:M  -> w_in (cols 0:C of slot 0);  rows M:M+E -> w_cond packed (slot 1)
# W_step  [208, 128]   : rows 0:C w_mlp1 | rows C:C+4C w_mlp2(pad) | rows C+4C:+C+S [w_dif;w_spk] packed
# W_conv  [3C, L*128]  : layer l at cols l*128, data width 2C
# W_back  [C, (L+2)*128]: per-layer w_res at l*128, then w_skip, then w_out (each its own 128 slot)
R_MLP1 = 0
R_MLP2 = C
R_DS = C + 4 * C
R_END = C + 4 * C + C + D_SPK            # 208

W_SKIP = L * 128                          # 512
W_OUT = (L + 1) * 128                     # 640

# bias slab [1, BIAS_W]
B_FRONT = 0                               # [256]  b_in (padded) || b_cond packed
B_MLP1 = 256                              # [128]
B_MLP2 = 384                              # [128]  (padded)
B_DS = 512                                # [128]  b_dif + b_spk packed (pre-summed)
B_CONV = 640                              # [L*128]
B_RES = B_CONV + L * 128                  # 1152, [L*128]
B_SKIP = B_RES + L * 128                  # 1664
B_OUT = B_SKIP + 128                      # 1792
BIAS_W = B_OUT + 128                      # 1920


def denoiser_kernel(xf_ref, st_ref, wfront_ref, wstep_ref, wconv_ref, wback_ref, bias_ref, o_ref):
    f32 = jnp.float32

    def mm(a, b):
        return jnp.dot(a, b, preferred_element_type=f32)

    # ---- input projection + conditioner projections, fused into one [BT,M+E]@[M+E,256] ----
    front = mm(xf_ref[...], wfront_ref[...]) + bias_ref[:, B_FRONT:B_FRONT + 256]   # [BT, 256]
    x = jnp.maximum(front[:, 0:C], 0.0)        # ReLU (the extra F.relu in forward() is idempotent)
    condp_all = front[:, 128:256]              # [BT, L*C] conditioner proj, all layers

    # ---- diffusion-step MLP + per-layer step/speaker projections (once, already frame-broadcast) ----
    st = st_ref[...]                           # [BT, C+S] = demb || spk (repeated over T in wrapper)
    h = mm(st[:, 0:C], wstep_ref[R_MLP1:R_MLP1 + C, :]) + bias_ref[:, B_MLP1:B_MLP1 + 128]
    h = h * jnp.tanh(jax.nn.softplus(h))       # Mish
    d = (mm(h, wstep_ref[R_MLP2:R_MLP2 + 4 * C, :]) + bias_ref[:, B_MLP2:B_MLP2 + 128])[:, 0:C]
    ds = jnp.concatenate([d, st[:, C:C + D_SPK]], axis=-1)                           # [BT, C+S]
    dsp_all = mm(ds, wstep_ref[R_DS:R_END, :]) + bias_ref[:, B_DS:B_DS + 128]        # [BT, L*C]
    pre_all = condp_all + dsp_all              # step + speaker + conditioner, all layers, [BT, 128]

    # masks for the k=3 conv halo: zero the t==0 row for the t-1 tap and the t==T-1 row for the
    # t+1 tap (this also kills the cross-batch wrap introduced by rolling the stacked [BT, C] tile)
    rows = jax.lax.broadcasted_iota(jnp.int32, (BT, 1), 0)
    m_prev = ((rows % T) != 0).astype(f32)
    m_next = ((rows % T) != (T - 1)).astype(f32)

    skip_sum = jnp.zeros((BT, C), f32)
    for l in range(L):                         # residual layers (unrolled, L=4)
        yin = x + pre_all[:, l * C:(l + 1) * C]                    # [BT, C]
        ym1 = pltpu.roll(yin, 1, 0) * m_prev                       # yin[t-1], zero at t==0
        yp1 = pltpu.roll(yin, BT - 1, 0) * m_next                  # yin[t+1] (shift -1 mod BT)
        yin3 = jnp.concatenate([ym1, yin, yp1], axis=-1)           # [BT, 3C]
        conv = (mm(yin3, wconv_ref[:, l * 128:(l + 1) * 128])
                + bias_ref[:, B_CONV + l * 128:B_CONV + (l + 1) * 128])   # [BT,128]; cols 0:2C valid
        z = jax.nn.sigmoid(conv[:, 0:C]) * jnp.tanh(conv[:, C:2 * C])      # gated activation
        outp = (mm(z, wback_ref[:, l * 128:(l + 1) * 128])
                + bias_ref[:, B_RES + l * 128:B_RES + (l + 1) * 128])      # [BT,128]; cols 0:2C valid
        x = (x + outp[:, 0:C]) / SQRT2                             # residual
        skip_sum = skip_sum + outp[:, C:2 * C]                     # skip

    sp = (mm(skip_sum / SQRT_L, wback_ref[:, W_SKIP:W_SKIP + 128])
          + bias_ref[:, B_SKIP:B_SKIP + 128])                      # [BT,128]; cols 0:C valid
    xs = jnp.maximum(sp[:, 0:C], 0.0)
    # lane-dense [BT, 128] output slab (valid cols 0:N_MEL); wrapper slices back to 8 mel channels
    o_ref[...] = mm(xs, wback_ref[:, W_OUT:W_OUT + 128]) + bias_ref[:, B_OUT:B_OUT + 128]


def _pad_lanes(a, n=128):
    return jnp.pad(a, ((0, 0), (0, n - a.shape[-1])))


def _lane_pack(w):
    """[L, K, N] -> [K, L*N] with layer l occupying cols l*N:(l+1)*N."""
    return jnp.transpose(w, (1, 0, 2)).reshape(w.shape[1], L * w.shape[2])


def _pack_params(p):
    f32 = jnp.float32
    w_cond_p = _lane_pack(p["w_cond"])                 # [E, L*C]
    w_dif_p = _lane_pack(p["w_dif"])                   # [C, L*C]
    w_spk_p = _lane_pack(p["w_spk"])                   # [S, L*C]

    w_front = jnp.zeros((N_MEL + D_ENC, 256), f32)
    w_front = w_front.at[:N_MEL, :C].set(p["w_in"])
    w_front = w_front.at[N_MEL:, 128:].set(w_cond_p)

    w_step = jnp.concatenate(
        [p["w_mlp1"], _pad_lanes(p["w_mlp2"]), w_dif_p, w_spk_p], axis=0)       # [208, 128]

    w_conv = jnp.concatenate(
        [_pad_lanes(p["w_conv"][l].reshape(3 * C, 2 * C)) for l in range(L)], axis=1)   # [96, L*128]

    w_back = jnp.concatenate(
        [_pad_lanes(p["w_res"][l]) for l in range(L)]
        + [_pad_lanes(p["w_skip"]), _pad_lanes(p["w_out"])], axis=1)            # [32, (L+2)*128]

    b_cond_p = _lane_pack(p["b_cond"])                 # [1, L*C]
    b_dif_p = _lane_pack(p["b_dif"])
    b_spk_p = _lane_pack(p["b_spk"])
    bias = jnp.concatenate(
        [_pad_lanes(p["b_in"]), b_cond_p,              # B_FRONT : +256
         p["b_mlp1"],                                  # B_MLP1
         _pad_lanes(p["b_mlp2"]),                      # B_MLP2
         b_dif_p + b_spk_p,                            # B_DS (pre-summed step+speaker biases)
         *[_pad_lanes(p["b_conv"][l]) for l in range(L)],   # B_CONV
         *[_pad_lanes(p["b_res"][l]) for l in range(L)],    # B_RES
         _pad_lanes(p["b_skip"]),                      # B_SKIP
         _pad_lanes(p["b_out"])],                      # B_OUT
        axis=1)                                        # [1, BIAS_W]
    return w_front, w_step, w_conv, w_back, bias


@jax.jit
def denoiser_forward(mel, diffusion_step, conditioner, speaker_emb, params):
    """mel [B,1,M,T], diffusion_step [B], conditioner [B,E,T], speaker_emb [B,S] -> [B,1,M,T]."""
    f32 = jnp.float32

    # channels-last, batch stacked along rows (layout plumbing only)
    mel_tc = jnp.transpose(mel[:, 0], (0, 2, 1)).reshape(BT, N_MEL).astype(f32)        # [BT, M]
    cond_tc = jnp.transpose(conditioner, (0, 2, 1)).reshape(BT, D_ENC).astype(f32)     # [BT, E]
    x_front = jnp.concatenate([mel_tc, cond_tc], axis=-1)                              # [BT, M+E]

    # Sinusoidal diffusion-step embedding (tiny glue; the MLP runs in-kernel).
    half = C // 2
    scale = math.log(10000.0) / (half - 1)
    freqs = jnp.exp(jnp.arange(half, dtype=f32) * -scale)
    e = diffusion_step.astype(f32)[:, None] * freqs[None, :]
    demb = jnp.concatenate([jnp.sin(e), jnp.cos(e)], axis=-1)                          # [B, C]
    step_b = jnp.concatenate([demb, speaker_emb.astype(f32)], axis=-1)                 # [B, C+S]
    step_bt = jnp.repeat(step_b, T, axis=0)                                            # [BT, C+S]

    w_front, w_step, w_conv, w_back, bias = _pack_params(params)

    out = pl.pallas_call(
        denoiser_kernel,
        grid=(1,),   # single invocation: whole (tiny) problem lives in VMEM at once
        in_specs=[
            pl.BlockSpec((BT, N_MEL + D_ENC), lambda i: (0, 0)),
            pl.BlockSpec((BT, C + D_SPK), lambda i: (0, 0)),
            pl.BlockSpec((N_MEL + D_ENC, 256), lambda i: (0, 0)),
            pl.BlockSpec((R_END, 128), lambda i: (0, 0)),
            pl.BlockSpec((3 * C, L * 128), lambda i: (0, 0)),
            pl.BlockSpec((C, (L + 2) * 128), lambda i: (0, 0)),
            pl.BlockSpec((1, BIAS_W), lambda i: (0, 0)),
        ],
        out_specs=pl.BlockSpec((BT, 128), lambda i: (0, 0)),
        out_shape=jax.ShapeDtypeStruct((BT, 128), jnp.float32),
        compiler_params=pltpu.CompilerParams(dimension_semantics=("arbitrary",)),
    )(x_front, step_bt, w_front, w_step, w_conv, w_back, bias)

    mel_out = out[:, :N_MEL].reshape(B, T, N_MEL)
    return jnp.transpose(mel_out, (0, 2, 1))[:, None, :, :]                            # [B, 1, M, T]


def init_params(key):
    keys = iter(jax.random.split(key, 32))

    def w(shape, scale=0.1):
        return scale * jax.random.normal(next(keys), shape, jnp.float32)

    # Torch conv/linear weights transposed to channels-last matmul form:
    #   Conv1d(k=1) weight [out, in, 1] -> [in, out];  Linear [out, in] -> [in, out]
    #   Conv1d(k=3) weight [out, in, 3] -> [3, in, out]  (index 0 multiplies the t-1 sample)
    return dict(
        w_in=w((N_MEL, C)), b_in=w((1, C)),
        w_mlp1=w((C, 4 * C)), b_mlp1=w((1, 4 * C)),
        w_mlp2=w((4 * C, C)), b_mlp2=w((1, C)),
        w_dif=w((L, C, C)), b_dif=w((L, 1, C)),
        w_cond=w((L, D_ENC, C)), b_cond=w((L, 1, C)),
        w_spk=w((L, D_SPK, C)), b_spk=w((L, 1, C)),
        w_conv=w((L, 3, C, 2 * C)), b_conv=w((L, 1, 2 * C)),
        w_res=w((L, C, 2 * C)), b_res=w((L, 1, 2 * C)),
        w_skip=w((C, C)), b_skip=w((1, C)),
        w_out=jnp.zeros((C, N_MEL), jnp.float32),   # nn.init.zeros_(output_projection.conv.weight)
        b_out=w((1, N_MEL)),
    )


if __name__ == "__main__":
    key = jax.random.PRNGKey(0)
    kp, k1, k2, k3, k4 = jax.random.split(key, 5)

    params = init_params(kp)
    mel = jax.random.normal(k1, (B, 1, N_MEL, T), jnp.float32)
    diffusion_step = jax.random.randint(k2, (B,), 0, 100).astype(jnp.float32)
    conditioner = jax.random.normal(k3, (B, D_ENC, T), jnp.float32)
    speaker_emb = jax.random.normal(k4, (B, D_SPK), jnp.float32)

    out = denoiser_forward(mel, diffusion_step, conditioner, speaker_emb, params)
    out = jax.block_until_ready(out)

    assert out.shape == (B, 1, N_MEL, T), out.shape
    assert bool(jnp.all(jnp.isfinite(out)))
    print("KERNEL_OK")
</pallas_src>

<mosaic_0001>
module attributes {stable_mosaic.version = 11 : i64} {
  func.func @denoiser_kernel(%arg0: i32, %arg1: memref<32x24xf32, #tpu.memory_space<vmem>>, %arg2: memref<32x48xf32, #tpu.memory_space<vmem>>, %arg3: memref<24x256xf32, #tpu.memory_space<vmem>>, %arg4: memref<208x128xf32, #tpu.memory_space<vmem>>, %arg5: memref<96x512xf32, #tpu.memory_space<vmem>>, %arg6: memref<32x768xf32, #tpu.memory_space<vmem>>, %arg7: memref<1x1920xf32, #tpu.memory_space<vmem>>, %arg8: memref<32x128xf32, #tpu.memory_space<vmem>>) attributes {dimension_semantics = [#tpu.dimension_semantics<arbitrary>], iteration_bounds = array<i64: 1>, scalar_prefetch = 0 : i64, scratch_operands = 0 : i64, tpu.core_type = #tpu.core_type<tc>, window_params = [{pipeline_mode = #tpu.pipeline_mode<synchronous>, transform_indices = @transform_0, window_bounds = array<i64: 32, 24>}, {pipeline_mode = #tpu.pipeline_mode<synchronous>, transform_indices = @transform_1, window_bounds = array<i64: 32, 48>}, {pipeline_mode = #tpu.pipeline_mode<synchronous>, transform_indices = @transform_2, window_bounds = array<i64: 24, 256>}, {pipeline_mode = #tpu.pipeline_mode<synchronous>, transform_indices = @transform_3, window_bounds = array<i64: 208, 128>}, {pipeline_mode = #tpu.pipeline_mode<synchronous>, transform_indices = @transform_4, window_bounds = array<i64: 96, 512>}, {pipeline_mode = #tpu.pipeline_mode<synchronous>, transform_indices = @transform_5, window_bounds = array<i64: 32, 768>}, {pipeline_mode = #tpu.pipeline_mode<synchronous>, transform_indices = @transform_6, window_bounds = array<i64: 1, 1920>}, {pipeline_mode = #tpu.pipeline_mode<synchronous>, transform_indices = @transform_7, window_bounds = array<i64: 32, 128>}]} {
    %c0 = arith.constant 0 : index
    %c0_0 = arith.constant 0 : index
    %0 = vector.load %arg1[%c0, %c0_0] : memref<32x24xf32, #tpu.memory_space<vmem>>, vector<32x24xf32>
    %c0_1 = arith.constant 0 : index
    %c0_2 = arith.constant 0 : index
    %1 = vector.load %arg3[%c0_1, %c0_2] : memref<24x256xf32, #tpu.memory_space<vmem>>, vector<24x256xf32>
    %cst = arith.constant dense<0.000000e+00> : vector<32x256xf32>
    %2 = tpu.matmul %0, %1, %cst {dimension_numbers = #tpu.dot_dimension_numbers<[1], [0], [0], [1], [0, 0, 1, 1], [], []>} : vector<32x24xf32>, vector<24x256xf32>, vector<32x256xf32> -> vector<32x256xf32>
    %c0_3 = arith.constant 0 : index
    %c0_4 = arith.constant 0 : index
    %3 = vector.load %arg7[%c0_3, %c0_4] : memref<1x1920xf32, #tpu.memory_space<vmem>>, vector<1x256xf32>
    %4 = vector.broadcast %3 : vector<1x256xf32> to vector<32x256xf32>
    %5 = arith.addf %2, %4 : vector<32x256xf32>
    %6 = vector.extract_strided_slice %5 {offsets = [0, 0], sizes = [32, 32], strides = [1, 1]} : vector<32x256xf32> to vector<32x32xf32>
    %cst_5 = arith.constant 0.000000e+00 : f32
    %7 = vector.broadcast %cst_5 : f32 to vector<32x32xf32>
    %8 = arith.maximumf %6, %7 : vector<32x32xf32>
    %9 = vector.extract_strided_slice %5 {offsets = [0, 128], sizes = [32, 128], strides = [1, 1]} : vector<32x256xf32> to vector<32x128xf32>
    %c0_6 = arith.constant 0 : index
    %c0_7 = arith.constant 0 : index
    %10 = vector.load %arg2[%c0_6, %c0_7] : memref<32x48xf32, #tpu.memory_space<vmem>>, vector<32x48xf32>
    %11 = vector.extract_strided_slice %10 {offsets = [0, 0], sizes = [32, 32], strides = [1, 1]} : vector<32x48xf32> to vector<32x32xf32>
    %c0_8 = arith.constant 0 : index
    %c0_9 = arith.constant 0 : index
    %12 = vector.load %arg4[%c0_8, %c0_9] : memref<208x128xf32, #tpu.memory_space<vmem>>, vector<32x128xf32>
    %cst_10 = arith.constant dense<0.000000e+00> : vector<32x128xf32>
    %13 = tpu.matmul %11, %12, %cst_10 {dimension_numbers = #tpu.dot_dimension_numbers<[1], [0], [0], [1], [0, 0, 1, 1], [], []>} : vector<32x32xf32>, vector<32x128xf32>, vector<32x128xf32> -> vector<32x128xf32>
    %c0_11 = arith.constant 0 : index
    %c256 = arith.constant 256 : index
    %14 = vector.load %arg7[%c0_11, %c256] : memref<1x1920xf32, #tpu.memory_space<vmem>>, vector<1x128xf32>
    %15 = vector.broadcast %14 : vector<1x128xf32> to vector<32x128xf32>
    %16 = arith.addf %13, %15 : vector<32x128xf32>
    %cst_12 = arith.constant 0.000000e+00 : f32
    %17 = vector.broadcast %cst_12 : f32 to vector<32x128xf32>
    %18 = arith.maximumf %16, %17 : vector<32x128xf32>
    %19 = vector.broadcast %cst_12 : f32 to vector<32x128xf32>
    %20 = arith.subf %16, %19 : vector<32x128xf32>
    %21 = arith.cmpf one, %20, %20 : vector<32x128xf32>
    %22 = vector.broadcast %cst_12 : f32 to vector<32x128xf32>
    %23 = arith.addf %16, %22 : vector<32x128xf32>
    %24 = math.absf %20 : vector<32x128xf32>
    %cst_13 = arith.constant 0.000000e+00 : f32
    %25 = vector.broadcast %cst_13 : f32 to vector<32x128xf32>
    %26 = arith.subf %25, %24 : vector<32x128xf32>
    %27 = math.exp %26 : vector<32x128xf32>
    %28 = math.log1p %27 : vector<32x128xf32>
    %29 = arith.addf %18, %28 : vector<32x128xf32>
    %30 = arith.select %21, %23, %29 : vector<32x128xi1>, vector<32x128xf32>
    %31 = math.tanh %30 : vector<32x128xf32>
    %32 = arith.mulf %16, %31 : vector<32x128xf32>
    %c32 = arith.constant 32 : index
    %c0_14 = arith.constant 0 : index
    %33 = vector.load %arg4[%c32, %c0_14] : memref<208x128xf32, #tpu.memory_space<vmem>>, vector<128x128xf32>
    %cst_15 = arith.constant dense<0.000000e+00> : vector<32x128xf32>
    %34 = tpu.matmul %32, %33, %cst_15 {dimension_numbers = #tpu.dot_dimension_numbers<[1], [0], [0], [1], [0, 0, 1, 1], [], []>} : vector<32x128xf32>, vector<128x128xf32>, vector<32x128xf32> -> vector<32x128xf32>
    %c0_16 = arith.constant 0 : index
    %c384 = arith.constant 384 : index
    %35 = vector.load %arg7[%c0_16, %c384] : memref<1x1920xf32, #tpu.memory_space<vmem>>, vector<1x128xf32>
    %36 = vector.broadcast %35 : vector<1x128xf32> to vector<32x128xf32>
    %37 = arith.addf %34, %36 : vector<32x128xf32>
    %38 = vector.extract_strided_slice %37 {offsets = [0, 0], sizes = [32, 32], strides = [1, 1]} : vector<32x128xf32> to vector<32x32xf32>
    %39 = vector.extract_strided_slice %10 {offsets = [0, 32], sizes = [32, 16], strides = [1, 1]} : vector<32x48xf32> to vector<32x16xf32>
    %40 = tpu.concatenate %38, %39 in 1 : vector<32x32xf32>, vector<32x16xf32> -> vector<32x48xf32>
    %c160 = arith.constant 160 : index
    %c0_17 = arith.constant 0 : index
    %41 = vector.load %arg4[%c160, %c0_17] : memref<208x128xf32, #tpu.memory_space<vmem>>, vector<48x128xf32>
    %cst_18 = arith.constant dense<0.000000e+00> : vector<32x128xf32>
    %42 = tpu.matmul %40, %41, %cst_18 {dimension_numbers = #tpu.dot_dimension_numbers<[1], [0], [0], [1], [0, 0, 1, 1], [], []>} : vector<32x48xf32>, vector<48x128xf32>, vector<32x128xf32> -> vector<32x128xf32>
    %c0_19 = arith.constant 0 : index
    %c512 = arith.constant 512 : index
    %43 = vector.load %arg7[%c0_19, %c512] : memref<1x1920xf32, #tpu.memory_space<vmem>>, vector<1x128xf32>
    %44 = vector.broadcast %43 : vector<1x128xf32> to vector<32x128xf32>
    %45 = arith.addf %42, %44 : vector<32x128xf32>
    %46 = arith.addf %9, %45 : vector<32x128xf32>
    %47 = tpu.iota {dimensions = array<i32: 0>} : vector<32x1xi32>
    %c16_i32 = arith.constant 16 : i32
    %c0_i32 = arith.constant 0 : i32
    %48 = arith.cmpi eq, %c16_i32, %c0_i32 : i32
    %c1_i32 = arith.constant 1 : i32
    %49 = arith.select %48, %c1_i32, %c16_i32 : i32
    %50 = vector.broadcast %49 : i32 to vector<32x1xi32>
    %51 = arith.remsi %47, %50 : vector<32x1xi32>
    %c0_i32_20 = arith.constant 0 : i32
    %52 = vector.broadcast %c0_i32_20 : i32 to vector<32x1xi32>
    %53 = arith.cmpi ne, %51, %52 : vector<32x1xi32>
    %c0_i32_21 = arith.constant 0 : i32
    %54 = vector.broadcast %c0_i32_21 : i32 to vector<32x1xi32>
    %55 = arith.cmpi slt, %51, %54 : vector<32x1xi32>
    %c0_i32_22 = arith.constant 0 : i32
    %56 = arith.cmpi slt, %49, %c0_i32_22 : i32
    %57 = vector.broadcast %56 : i1 to vector<32x1xi1>
    %58 = vector.broadcast %57 : vector<32x1xi1> to vector<32x1xi1>
    %59 = arith.xori %55, %58 : vector<32x1xi1>
    %60 = arith.andi %59, %53 : vector<32x1xi1>
    %61 = vector.broadcast %49 : i32 to vector<32x1xi32>
    %62 = arith.addi %51, %61 : vector<32x1xi32>
    %63 = arith.select %60, %62, %51 : vector<32x1xi1>, vector<32x1xi32>
    %c0_i32_23 = arith.constant 0 : i32
    %64 = vector.broadcast %c0_i32_23 : i32 to vector<32x1xi32>
    %65 = arith.cmpi ne, %63, %64 : vector<32x1xi32>
    %66 = arith.extui %65 : vector<32x1xi1> to vector<32x1xi32>
    %67 = arith.sitofp %66 : vector<32x1xi32> to vector<32x1xf32>
    %c16_i32_24 = arith.constant 16 : i32
    %c0_i32_25 = arith.constant 0 : i32
    %68 = arith.cmpi eq, %c16_i32_24, %c0_i32_25 : i32
    %c1_i32_26 = arith.constant 1 : i32
    %69 = arith.select %68, %c1_i32_26, %c16_i32_24 : i32
    %70 = vector.broadcast %69 : i32 to vector<32x1xi32>
    %71 = arith.remsi %47, %70 : vector<32x1xi32>
    %c0_i32_27 = arith.constant 0 : i32
    %72 = vector.broadcast %c0_i32_27 : i32 to vector<32x1xi32>
    %73 = arith.cmpi ne, %71, %72 : vector<32x1xi32>
    %c0_i32_28 = arith.constant 0 : i32
    %74 = vector.broadcast %c0_i32_28 : i32 to vector<32x1xi32>
    %75 = arith.cmpi slt, %71, %74 : vector<32x1xi32>
    %c0_i32_29 = arith.constant 0 : i32
    %76 = arith.cmpi slt, %69, %c0_i32_29 : i32
    %77 = vector.broadcast %76 : i1 to vector<32x1xi1>
    %78 = vector.broadcast %77 : vector<32x1xi1> to vector<32x1xi1>
    %79 = arith.xori %75, %78 : vector<32x1xi1>
    %80 = arith.andi %79, %73 : vector<32x1xi1>
    %81 = vector.broadcast %69 : i32 to vector<32x1xi32>
    %82 = arith.addi %71, %81 : vector<32x1xi32>
    %83 = arith.select %80, %82, %71 : vector<32x1xi1>, vector<32x1xi32>
    %c15_i32 = arith.constant 15 : i32
    %84 = vector.broadcast %c15_i32 : i32 to vector<32x1xi32>
    %85 = arith.cmpi ne, %83, %84 : vector<32x1xi32>
    %86 = arith.extui %85 : vector<32x1xi1> to vector<32x1xi32>
    %87 = arith.sitofp %86 : vector<32x1xi32> to vector<32x1xf32>
    %cst_30 = arith.constant 0.000000e+00 : f32
    %88 = vector.broadcast %cst_30 : f32 to vector<32x32xf32>
    %89 = vector.extract_strided_slice %46 {offsets = [0, 0], sizes = [32, 32], strides = [1, 1]} : vector<32x128xf32> to vector<32x32xf32>
    %90 = arith.addf %8, %89 : vector<32x32xf32>
    %c1_i32_31 = arith.constant 1 : i32
    %91 = tpu.dynamic_rotate %90 by %c1_i32_31 dim 0 : vector<32x32xf32>, i32 -> vector<32x32xf32>
    %92 = vector.broadcast %67 : vector<32x1xf32> to vector<32x32xf32>
    %93 = arith.mulf %91, %92 : vector<32x32xf32>
    %c31_i32 = arith.constant 31 : i32
    %94 = tpu.dynamic_rotate %90 by %c31_i32 dim 0 : vector<32x32xf32>, i32 -> vector<32x32xf32>
    %95 = vector.broadcast %87 : vector<32x1xf32> to vector<32x32xf32>
    %96 = arith.mulf %94, %95 : vector<32x32xf32>
    %97 = tpu.concatenate %93, %90, %96 in 1 : vector<32x32xf32>, vector<32x32xf32>, vector<32x32xf32> -> vector<32x96xf32>
    %c0_32 = arith.constant 0 : index
    %c0_33 = arith.constant 0 : index
    %98 = vector.load %arg5[%c0_32, %c0_33] : memref<96x512xf32, #tpu.memory_space<vmem>>, vector<96x128xf32>
    %cst_34 = arith.constant dense<0.000000e+00> : vector<32x128xf32>
    %99 = tpu.matmul %97, %98, %cst_34 {dimension_numbers = #tpu.dot_dimension_numbers<[1], [0], [0], [1], [0, 0, 1, 1], [], []>} : vector<32x96xf32>, vector<96x128xf32>, vector<32x128xf32> -> vector<32x128xf32>
    %c0_35 = arith.constant 0 : index
    %c640 = arith.constant 640 : index
    %100 = vector.load %arg7[%c0_35, %c640] : memref<1x1920xf32, #tpu.memory_space<vmem>>, vector<1x128xf32>
    %101 = vector.broadcast %100 : vector<1x128xf32> to vector<32x128xf32>
    %102 = arith.addf %99, %101 : vector<32x128xf32>
    %103 = vector.extract_strided_slice %102 {offsets = [0, 0], sizes = [32, 32], strides = [1, 1]} : vector<32x128xf32> to vector<32x32xf32>
    %104 = arith.negf %103 : vector<32x32xf32>
    %105 = math.exp %104 : vector<32x32xf32>
    %cst_36 = arith.constant 1.000000e+00 : f32
    %106 = vector.broadcast %cst_36 : f32 to vector<32x32xf32>
    %107 = arith.addf %106, %105 : vector<32x32xf32>
    %108 = arith.divf %106, %107 : vector<32x32xf32>
    %109 = vector.extract_strided_slice %102 {offsets = [0, 32], sizes = [32, 32], strides = [1, 1]} : vector<32x128xf32> to vector<32x32xf32>
    %110 = math.tanh %109 : vector<32x32xf32>
    %111 = arith.mulf %108, %110 : vector<32x32xf32>
    %c0_37 = arith.constant 0 : index
    %c0_38 = arith.constant 0 : index
    %112 = vector.load %arg6[%c0_37, %c0_38] : memref<32x768xf32, #tpu.memory_space<vmem>>, vector<32x128xf32>
    %cst_39 = arith.constant dense<0.000000e+00> : vector<32x128xf32>
    %113 = tpu.matmul %111, %112, %cst_39 {dimension_numbers = #tpu.dot_dimension_numbers<[1], [0], [0], [1], [0, 0, 1, 1], [], []>} : vector<32x32xf32>, vector<32x128xf32>, vector<32x128xf32> -> vector<32x128xf32>
    %c0_40 = arith.constant 0 : index
    %c1152 = arith.constant 1152 : index
    %114 = vector.load %arg7[%c0_40, %c1152] : memref<1x1920xf32, #tpu.memory_space<vmem>>, vector<1x128xf32>
    %115 = vector.broadcast %114 : vector<1x128xf32> to vector<32x128xf32>
    %116 = arith.addf %113, %115 : vector<32x128xf32>
    %117 = vector.extract_strided_slice %116 {offsets = [0, 0], sizes = [32, 32], strides = [1, 1]} : vector<32x128xf32> to vector<32x32xf32>
    %118 = arith.addf %8, %117 : vector<32x32xf32>
    %cst_41 = arith.constant 1.41421354 : f32
    %119 = vector.broadcast %cst_41 : f32 to vector<32x32xf32>
    %120 = arith.divf %118, %119 : vector<32x32xf32>
    %121 = vector.extract_strided_slice %116 {offsets = [0, 32], sizes = [32, 32], strides = [1, 1]} : vector<32x128xf32> to vector<32x32xf32>
    %122 = arith.addf %88, %121 : vector<32x32xf32>
    %123 = vector.extract_strided_slice %46 {offsets = [0, 32], sizes = [32, 32], strides = [1, 1]} : vector<32x128xf32> to vector<32x32xf32>
    %124 = arith.addf %120, %123 : vector<32x32xf32>
    %c1_i32_42 = arith.constant 1 : i32
    %125 = tpu.dynamic_rotate %124 by %c1_i32_42 dim 0 : vector<32x32xf32>, i32 -> vector<32x32xf32>
    %126 = vector.broadcast %67 : vector<32x1xf32> to vector<32x32xf32>
    %127 = arith.mulf %125, %126 : vector<32x32xf32>
    %c31_i32_43 = arith.constant 31 : i32
    %128 = tpu.dynamic_rotate %124 by %c31_i32_43 dim 0 : vector<32x32xf32>, i32 -> vector<32x32xf32>
    %129 = vector.broadcast %87 : vector<32x1xf32> to vector<32x32xf32>
    %130 = arith.mulf %128, %129 : vector<32x32xf32>
    %131 = tpu.concatenate %127, %124, %130 in 1 : vector<32x32xf32>, vector<32x32xf32>, vector<32x32xf32> -> vector<32x96xf32>
    %c0_44 = arith.constant 0 : index
    %c128 = arith.constant 128 : index
    %132 = vector.load %arg5[%c0_44, %c128] : memref<96x512xf32, #tpu.memory_space<vmem>>, vector<96x128xf32>
    %cst_45 = arith.constant dense<0.000000e+00> : vector<32x128xf32>
    %133 = tpu.matmul %131, %132, %cst_45 {dimension_numbers = #tpu.dot_dimension_numbers<[1], [0], [0], [1], [0, 0, 1, 1], [], []>} : vector<32x96xf32>, vector<96x128xf32>, vector<32x128xf32> -> vector<32x128xf32>
    %c0_46 = arith.constant 0 : index
    %c768 = arith.constant 768 : index
    %134 = vector.load %arg7[%c0_46, %c768] : memref<1x1920xf32, #tpu.memory_space<vmem>>, vector<1x128xf32>
    %135 = vector.broadcast %134 : vector<1x128xf32> to vector<32x128xf32>
    %136 = arith.addf %133, %135 : vector<32x128xf32>
    %137 = vector.extract_strided_slice %136 {offsets = [0, 0], sizes = [32, 32], strides = [1, 1]} : vector<32x128xf32> to vector<32x32xf32>
    %138 = arith.negf %137 : vector<32x32xf32>
    %139 = math.exp %138 : vector<32x32xf32>
    %cst_47 = arith.constant 1.000000e+00 : f32
    %140 = vector.broadcast %cst_47 : f32 to vector<32x32xf32>
    %141 = arith.addf %140, %139 : vector<32x32xf32>
    %142 = arith.divf %140, %141 : vector<32x32xf32>
    %143 = vector.extract_strided_slice %136 {offsets = [0, 32], sizes = [32, 32], strides = [1, 1]} : vector<32x128xf32> to vector<32x32xf32>
    %144 = math.tanh %143 : vector<32x32xf32>
    %145 = arith.mulf %142, %144 : vector<32x32xf32>
    %c0_48 = arith.constant 0 : index
    %c128_49 = arith.constant 128 : index
    %146 = vector.load %arg6[%c0_48, %c128_49] : memref<32x768xf32, #tpu.memory_space<vmem>>, vector<32x128xf32>
    %cst_50 = arith.constant dense<0.000000e+00> : vector<32x128xf32>
    %147 = tpu.matmul %145, %146, %cst_50 {dimension_numbers = #tpu.dot_dimension_numbers<[1], [0], [0], [1], [0, 0, 1, 1], [], []>} : vector<32x32xf32>, vector<32x128xf32>, vector<32x128xf32> -> vector<32x128xf32>
    %c0_51 = arith.constant 0 : index
    %c1280 = arith.constant 1280 : index
    %148 = vector.load %arg7[%c0_51, %c1280] : memref<1x1920xf32, #tpu.memory_space<vmem>>, vector<1x128xf32>
    %149 = vector.broadcast %148 : vector<1x128xf32> to vector<32x128xf32>
    %150 = arith.addf %147, %149 : vector<32x128xf32>
    %151 = vector.extract_strided_slice %150 {offsets = [0, 0], sizes = [32, 32], strides = [1, 1]} : vector<32x128xf32> to vector<32x32xf32>
    %152 = arith.addf %120, %151 : vector<32x32xf32>
    %cst_52 = arith.constant 1.41421354 : f32
    %153 = vector.broadcast %cst_52 : f32 to vector<32x32xf32>
    %154 = arith.divf %152, %153 : vector<32x32xf32>
    %155 = vector.extract_strided_slice %150 {offsets = [0, 32], sizes = [32, 32], strides = [1, 1]} : vector<32x128xf32> to vector<32x32xf32>
    %156 = arith.addf %122, %155 : vector<32x32xf32>
    %157 = vector.extract_strided_slice %46 {offsets = [0, 64], sizes = [32, 32], strides = [1, 1]} : vector<32x128xf32> to vector<32x32xf32>
    %158 = arith.addf %154, %157 : vector<32x32xf32>
    %c1_i32_53 = arith.constant 1 : i32
    %159 = tpu.dynamic_rotate %158 by %c1_i32_53 dim 0 : vector<32x32xf32>, i32 -> vector<32x32xf32>
    %160 = vector.broadcast %67 : vector<32x1xf32> to vector<32x32xf32>
    %161 = arith.mulf %159, %160 : vector<32x32xf32>
    %c31_i32_54 = arith.constant 31 : i32
    %162 = tpu.dynamic_rotate %158 by %c31_i32_54 dim 0 : vector<32x32xf32>, i32 -> vector<32x32xf32>
    %163 = vector.broadcast %87 : vector<32x1xf32> to vector<32x32xf32>
    %164 = arith.mulf %162, %163 : vector<32x32xf32>
    %165 = tpu.concatenate %161, %158, %164 in 1 : vector<32x32xf32>, vector<32x32xf32>, vector<32x32xf32> -> vector<32x96xf32>
    %c0_55 = arith.constant 0 : index
    %c256_56 = arith.constant 256 : index
    %166 = vector.load %arg5[%c0_55, %c256_56] : memref<96x512xf32, #tpu.memory_space<vmem>>, vector<96x128xf32>
    %cst_57 = arith.constant dense<0.000000e+00> : vector<32x128xf32>
    %167 = tpu.matmul %165, %166, %cst_57 {dimension_numbers = #tpu.dot_dimension_numbers<[1], [0], [0], [1], [0, 0, 1, 1], [], []>} : vector<32x96xf32>, vector<96x128xf32>, vector<32x128xf32> -> vector<32x128xf32>
    %c0_58 = arith.constant 0 : index
    %c896 = arith.constant 896 : index
    %168 = vector.load %arg7[%c0_58, %c896] : memref<1x1920xf32, #tpu.memory_space<vmem>>, vector<1x128xf32>
    %169 = vector.broadcast %168 : vector<1x128xf32> to vector<32x128xf32>
    %170 = arith.addf %167, %169 : vector<32x128xf32>
    %171 = vector.extract_strided_slice %170 {offsets = [0, 0], sizes = [32, 32], strides = [1, 1]} : vector<32x128xf32> to vector<32x32xf32>
    %172 = arith.negf %171 : vector<32x32xf32>
    %173 = math.exp %172 : vector<32x32xf32>
    %cst_59 = arith.constant 1.000000e+00 : f32
    %174 = vector.broadcast %cst_59 : f32 to vector<32x32xf32>
    %175 = arith.addf %174, %173 : vector<32x32xf32>
    %176 = arith.divf %174, %175 : vector<32x32xf32>
    %177 = vector.extract_strided_slice %170 {offsets = [0, 32], sizes = [32, 32], strides = [1, 1]} : vector<32x128xf32> to vector<32x32xf32>
    %178 = math.tanh %177 : vector<32x32xf32>
    %179 = arith.mulf %176, %178 : vector<32x32xf32>
    %c0_60 = arith.constant 0 : index
    %c256_61 = arith.constant 256 : index
    %180 = vector.load %arg6[%c0_60, %c256_61] : memref<32x768xf32, #tpu.memory_space<vmem>>, vector<32x128xf32>
    %cst_62 = arith.constant dense<0.000000e+00> : vector<32x128xf32>
    %181 = tpu.matmul %179, %180, %cst_62 {dimension_numbers = #tpu.dot_dimension_numbers<[1], [0], [0], [1], [0, 0, 1, 1], [], []>} : vector<32x32xf32>, vector<32x128xf32>, vector<32x128xf32> -> vector<32x128xf32>
    %c0_63 = arith.constant 0 : index
    %c1408 = arith.constant 1408 : index
    %182 = vector.load %arg7[%c0_63, %c1408] : memref<1x1920xf32, #tpu.memory_space<vmem>>, vector<1x128xf32>
    %183 = vector.broadcast %182 : vector<1x128xf32> to vector<32x128xf32>
    %184 = arith.addf %181, %183 : vector<32x128xf32>
    %185 = vector.extract_strided_slice %184 {offsets = [0, 0], sizes = [32, 32], strides = [1, 1]} : vector<32x128xf32> to vector<32x32xf32>
    %186 = arith.addf %154, %185 : vector<32x32xf32>
    %cst_64 = arith.constant 1.41421354 : f32
    %187 = vector.broadcast %cst_64 : f32 to vector<32x32xf32>
    %188 = arith.divf %186, %187 : vector<32x32xf32>
    %189 = vector.extract_strided_slice %184 {offsets = [0, 32], sizes = [32, 32], strides = [1, 1]} : vector<32x128xf32> to vector<32x32xf32>
    %190 = arith.addf %156, %189 : vector<32x32xf32>
    %191 = vector.extract_strided_slice %46 {offsets = [0, 96], sizes = [32, 32], strides = [1, 1]} : vector<32x128xf32> to vector<32x32xf32>
    %192 = arith.addf %188, %191 : vector<32x32xf32>
    %c1_i32_65 = arith.constant 1 : i32
    %193 = tpu.dynamic_rotate %192 by %c1_i32_65 dim 0 : vector<32x32xf32>, i32 -> vector<32x32xf32>
    %194 = vector.broadcast %67 : vector<32x1xf32> to vector<32x32xf32>
    %195 = arith.mulf %193, %194 : vector<32x32xf32>
    %c31_i32_66 = arith.constant 31 : i32
    %196 = tpu.dynamic_rotate %192 by %c31_i32_66 dim 0 : vector<32x32xf32>, i32 -> vector<32x32xf32>
    %197 = vector.broadcast %87 : vector<32x1xf32> to vector<32x32xf32>
    %198 = arith.mulf %196, %197 : vector<32x32xf32>
    %199 = tpu.concatenate %195, %192, %198 in 1 : vector<32x32xf32>, vector<32x32xf32>, vector<32x32xf32> -> vector<32x96xf32>
    %c0_67 = arith.constant 0 : index
    %c384_68 = arith.constant 384 : index
    %200 = vector.load %arg5[%c0_67, %c384_68] : memref<96x512xf32, #tpu.memory_space<vmem>>, vector<96x128xf32>
    %cst_69 = arith.constant dense<0.000000e+00> : vector<32x128xf32>
    %201 = tpu.matmul %199, %200, %cst_69 {dimension_numbers = #tpu.dot_dimension_numbers<[1], [0], [0], [1], [0, 0, 1, 1], [], []>} : vector<32x96xf32>, vector<96x128xf32>, vector<32x128xf32> -> vector<32x128xf32>
    %c0_70 = arith.constant 0 : index
    %c1024 = arith.constant 1024 : index
    %202 = vector.load %arg7[%c0_70, %c1024] : memref<1x1920xf32, #tpu.memory_space<vmem>>, vector<1x128xf32>
    %203 = vector.broadcast %202 : vector<1x128xf32> to vector<32x128xf32>
    %204 = arith.addf %201, %203 : vector<32x128xf32>
    %205 = vector.extract_strided_slice %204 {offsets = [0, 0], sizes = [32, 32], strides = [1, 1]} : vector<32x128xf32> to vector<32x32xf32>
    %206 = arith.negf %205 : vector<32x32xf32>
    %207 = math.exp %206 : vector<32x32xf32>
    %cst_71 = arith.constant 1.000000e+00 : f32
    %208 = vector.broadcast %cst_71 : f32 to vector<32x32xf32>
    %209 = arith.addf %208, %207 : vector<32x32xf32>
    %210 = arith.divf %208, %209 : vector<32x32xf32>
    %211 = vector.extract_strided_slice %204 {offsets = [0, 32], sizes = [32, 32], strides = [1, 1]} : vector<32x128xf32> to vector<32x32xf32>
    %212 = math.tanh %211 : vector<32x32xf32>
    %213 = arith.mulf %210, %212 : vector<32x32xf32>
    %c0_72 = arith.constant 0 : index
    %c384_73 = arith.constant 384 : index
    %214 = vector.load %arg6[%c0_72, %c384_73] : memref<32x768xf32, #tpu.memory_space<vmem>>, vector<32x128xf32>
    %cst_74 = arith.constant dense<0.000000e+00> : vector<32x128xf32>
    %215 = tpu.matmul %213, %214, %cst_74 {dimension_numbers = #tpu.dot_dimension_numbers<[1], [0], [0], [1], [0, 0, 1, 1], [], []>} : vector<32x32xf32>, vector<32x128xf32>, vector<32x128xf32> -> vector<32x128xf32>
    %c0_75 = arith.constant 0 : index
    %c1536 = arith.constant 1536 : index
    %216 = vector.load %arg7[%c0_75, %c1536] : memref<1x1920xf32, #tpu.memory_space<vmem>>, vector<1x128xf32>
    %217 = vector.broadcast %216 : vector<1x128xf32> to vector<32x128xf32>
    %218 = arith.addf %215, %217 : vector<32x128xf32>
    %219 = vector.extract_strided_slice %218 {offsets = [0, 32], sizes = [32, 32], strides = [1, 1]} : vector<32x128xf32> to vector<32x32xf32>
    %220 = arith.addf %190, %219 : vector<32x32xf32>
    %cst_76 = arith.constant 2.000000e+00 : f32
    %221 = vector.broadcast %cst_76 : f32 to vector<32x32xf32>
    %222 = arith.divf %220, %221 : vector<32x32xf32>
    %c0_77 = arith.constant 0 : index
    %c512_78 = arith.constant 512 : index
    %223 = vector.load %arg6[%c0_77, %c512_78] : memref<32x768xf32, #tpu.memory_space<vmem>>, vector<32x128xf32>
    %cst_79 = arith.constant dense<0.000000e+00> : vector<32x128xf32>
    %224 = tpu.matmul %222, %223, %cst_79 {dimension_numbers = #tpu.dot_dimension_numbers<[1], [0], [0], [1], [0, 0, 1, 1], [], []>} : vector<32x32xf32>, vector<32x128xf32>, vector<32x128xf32> -> vector<32x128xf32>
    %c0_80 = arith.constant 0 : index
    %c1664 = arith.constant 1664 : index
    %225 = vector.load %arg7[%c0_80, %c1664] : memref<1x1920xf32, #tpu.memory_space<vmem>>, vector<1x128xf32>
    %226 = vector.broadcast %225 : vector<1x128xf32> to vector<32x128xf32>
    %227 = arith.addf %224, %226 : vector<32x128xf32>
    %228 = vector.extract_strided_slice %227 {offsets = [0, 0], sizes = [32, 32], strides = [1, 1]} : vector<32x128xf32> to vector<32x32xf32>
    %cst_81 = arith.constant 0.000000e+00 : f32
    %229 = vector.broadcast %cst_81 : f32 to vector<32x32xf32>
    %230 = arith.maximumf %228, %229 : vector<32x32xf32>
    %c0_82 = arith.constant 0 : index
    %c640_83 = arith.constant 640 : index
    %231 = vector.load %arg6[%c0_82, %c640_83] : memref<32x768xf32, #tpu.memory_space<vmem>>, vector<32x128xf32>
    %cst_84 = arith.constant dense<0.000000e+00> : vector<32x128xf32>
    %232 = tpu.matmul %230, %231, %cst_84 {dimension_numbers = #tpu.dot_dimension_numbers<[1], [0], [0], [1], [0, 0, 1, 1], [], []>} : vector<32x32xf32>, vector<32x128xf32>, vector<32x128xf32> -> vector<32x128xf32>
    %c0_85 = arith.constant 0 : index
    %c1792 = arith.constant 1792 : index
    %233 = vector.load %arg7[%c0_85, %c1792] : memref<1x1920xf32, #tpu.memory_space<vmem>>, vector<1x128xf32>
    %234 = vector.broadcast %233 : vector<1x128xf32> to vector<32x128xf32>
    %235 = arith.addf %232, %234 : vector<32x128xf32>
    %c0_86 = arith.constant 0 : index
    %c0_87 = arith.constant 0 : index
    %236 = vector.load %arg8[%c0_86, %c0_87] : memref<32x128xf32, #tpu.memory_space<vmem>>, vector<32x128xf32>
    tpu.vector_store %arg8[%c0_86, %c0_87], %235 {strides = array<i32>} : memref<32x128xf32, #tpu.memory_space<vmem>>, vector<32x128xf32>,
    return
  }
  func.func @transform_0(%arg0: i32) -> (i32, i32) {
    %c0_i32 = arith.constant 0 : i32
    %c0_i32_0 = arith.constant 0 : i32
    %c0_i32_1 = arith.constant 0 : i32
    return %c0_i32, %c0_i32_0 : i32, i32
  }
  func.func @transform_1(%arg0: i32) -> (i32, i32) {
    %c0_i32 = arith.constant 0 : i32
    %c0_i32_0 = arith.constant 0 : i32
    %c0_i32_1 = arith.constant 0 : i32
    return %c0_i32, %c0_i32_0 : i32, i32
  }
  func.func @transform_2(%arg0: i32) -> (i32, i32) {
    %c0_i32 = arith.constant 0 : i32
    %c0_i32_0 = arith.constant 0 : i32
    %c0_i32_1 = arith.constant 0 : i32
    return %c0_i32, %c0_i32_0 : i32, i32
  }
  func.func @transform_3(%arg0: i32) -> (i32, i32) {
    %c0_i32 = arith.constant 0 : i32
    %c0_i32_0 = arith.constant 0 : i32
    %c0_i32_1 = arith.constant 0 : i32
    return %c0_i32, %c0_i32_0 : i32, i32
  }
  func.func @transform_4(%arg0: i32) -> (i32, i32) {
    %c0_i32 = arith.constant 0 : i32
    %c0_i32_0 = arith.constant 0 : i32
    %c0_i32_1 = arith.constant 0 : i32
    return %c0_i32, %c0_i32_0 : i32, i32
  }
  func.func @transform_5(%arg0: i32) -> (i32, i32) {
    %c0_i32 = arith.constant 0 : i32
    %c0_i32_0 = arith.constant 0 : i32
    %c0_i32_1 = arith.constant 0 : i32
    return %c0_i32, %c0_i32_0 : i32, i32
  }
  func.func @transform_6(%arg0: i32) -> (i32, i32) {
    %c0_i32 = arith.constant 0 : i32
    %c0_i32_0 = arith.constant 0 : i32
    %c0_i32_1 = arith.constant 0 : i32
    return %c0_i32, %c0_i32_0 : i32, i32
  }
  func.func @transform_7(%arg0: i32) -> (i32, i32) {
    %c0_i32 = arith.constant 0 : i32
    %c0_i32_0 = arith.constant 0 : i32
    %c0_i32_1 = arith.constant 0 : i32
    return %c0_i32, %c0_i32_0 : i32, i32
  }
}

</mosaic_0001>

<llo_original>
// kernel: denoiser_forward.1
$region0: #{denoiser_forward.1}
  #allocation0 [shape = 'u32[]', space=smem, size = 0x4, offset = 0x4, fixed_abs, tag = 'smem constant byte address 0x4 - core index']
  #allocation1 [shape = 'u32[144,128]{1,0:T(1,128)}', space=vmem, size = 0x12000, scoped, tag = 'internal scratch']
  %s0 = inlined_call_operand.vmem [shape: f32[32,24], index: 0, kind: input, shape index: {}]
  %s1 = inlined_call_operand.vmem [shape: f32[32,48], index: 1, kind: input, shape index: {}]
  %s2 = inlined_call_operand.vmem [shape: f32[24,256], index: 2, kind: input, shape index: {}]
  %s3 = inlined_call_operand.vmem [shape: f32[208,128], index: 3, kind: input, shape index: {}]
  %s4 = inlined_call_operand.vmem [shape: f32[96,512], index: 4, kind: input, shape index: {}]
  %s5 = inlined_call_operand.vmem [shape: f32[32,768], index: 5, kind: input, shape index: {}]
  %s6 = inlined_call_operand.vmem [shape: f32[1,1920], index: 6, kind: input, shape index: {}]
  %s7 = inlined_call_operand.vmem [shape: f32[32,128], index: 7, kind: output, shape index: {}]
  %s8 = sld [smem:[#allocation0]]
  $region38: #{denoiser_forward.1} parent=0
    _
  %s10 = ssub.s32 1, %s8
  %s11 = scalar_select 0, %s10, %s8
  // Predicated region
  $region2: #{denoiser_forward.1} parent=0 // pred_check
    _
  $region3: #{denoiser_forward.1} parent=0 // pred_check_branch
    %13 = sbr.rel (0) target = $region5
  $region4: #{denoiser_forward.1} parent=0 // pred_region
    _
  $region5: #{denoiser_forward.1} parent=0 // pred_fallthru
    _
  // Predicated region
  $region6: #{denoiser_forward.1} parent=0 // pred_check
    _
  $region7: #{denoiser_forward.1} parent=0 // pred_check_branch
    %15 = sbr.rel (0) target = $region9
  $region8: #{denoiser_forward.1} parent=0 // pred_region
    _
  $region9: #{denoiser_forward.1} parent=0 // pred_fallthru
    _
  // Predicated region
  $region10: #{denoiser_forward.1} parent=0 // pred_check
    _
  $region11: #{denoiser_forward.1} parent=0 // pred_check_branch
    %17 = sbr.rel (0) target = $region13
  $region12: #{denoiser_forward.1} parent=0 // pred_region
    _
  $region13: #{denoiser_forward.1} parent=0 // pred_fallthru
    _
  // Predicated region
  $region14: #{denoiser_forward.1} parent=0 // pred_check
    _
  $region15: #{denoiser_forward.1} parent=0 // pred_check_branch
    %19 = sbr.rel (0) target = $region17
  $region16: #{denoiser_forward.1} parent=0 // pred_region
    _
  $region17: #{denoiser_forward.1} parent=0 // pred_fallthru
    _
  // Predicated region
  $region18: #{denoiser_forward.1} parent=0 // pred_check
    _
  $region19: #{denoiser_forward.1} parent=0 // pred_check_branch
    %21 = sbr.rel (0) target = $region21
  $region20: #{denoiser_forward.1} parent=0 // pred_region
    _
  $region21: #{denoiser_forward.1} parent=0 // pred_fallthru
    _
  // Predicated region
  $region22: #{denoiser_forward.1} parent=0 // pred_check
    _
  $region23: #{denoiser_forward.1} parent=0 // pred_check_branch
    %23 = sbr.rel (0) target = $region25
  $region24: #{denoiser_forward.1} parent=0 // pred_region
    _
  $region25: #{denoiser_forward.1} parent=0 // pred_fallthru
    _
  // Predicated region
  $region26: #{denoiser_forward.1} parent=0 // pred_check
    _
  $region27: #{denoiser_forward.1} parent=0 // pred_check_branch
    %25 = sbr.rel (0) target = $region29
  $region28: #{denoiser_forward.1} parent=0 // pred_region
    _
  $region29: #{denoiser_forward.1} parent=0 // pred_fallthru
    _
  %v26 = vld [vmem:[%s0] sm:$0xff]
  %v27 = vld [vmem:[%s0 + $0x8] sm:$0xff]
  %v28 = vld [vmem:[%s0 + $0x10] sm:$0xff]
  %v29 = vld [vmem:[%s0 + $0x18] sm:$0xff]
  %v30 = vld [vmem:[%s2] sm:$0xff]
  %v31 = vld [vmem:[%s2 + $0x8] sm:$0xff]
  %v32 = vld [vmem:[%s2 + $0x10] sm:$0xff]
  %v33 = vld [vmem:[%s2 + $0x18] sm:$0xff]
  %v34 = vld [vmem:[%s2 + $0x20] sm:$0xff]
  %v35 = vld [vmem:[%s2 + $0x28] sm:$0xff]
  %v36 = vld [vmem:[%s6] sm:$0x3]
  %v38 = vlaneseq
  %v39 = vshrl.u32 %v38, 7
  %v40 = vsub.s32 0, %v39
  %v41 = vrot.slane %v36, %v40
  %v42 = vlaneseq
  %v43 = vshrl.u32 %v42, 7
  %v44 = vsub.s32 1, %v43
  %v45 = vrot.slane %v36, %v44
  %vm48 = vcmask 195584
  %v50 = vsel %vm48, %v26, 0
  %v53 = vsel %vm48, %v27, 0
  %v56 = vsel %vm48, %v28, 0
  %v59 = vsel %vm48, %v29, 0
  %61 = vmatprep.subr.mxu0 %v31
  %62 = vmatpush1.msra.mxu0 %v30
  %63 = vmatprep.subr.mxu0 %v33
  %64 = vmatpush1.msra.mxu0 %v32
  %65 = vmatprep.subr.mxu0 %v35
  %66 = vmatpush1.msra.mxu0 %v34
  %67 = vmatprep.subr.mxu0 0.0
  %68 = vmatpush1.msra.mxu0 0.0
  %69 = vmatprep.subr.mxu0 0.0
  %70 = vmatpush1.msra.mxu0 0.0
  %71 = vmatprep.subr.mxu0 0.0
  %72 = vmatpush1.msra.mxu0 0.0
  %73 = vmatprep.subr.mxu0 0.0
  %74 = vmatpush1.msra.mxu0 0.0
  %75 = vmatprep.subr.mxu0 0.0
  %76 = vmatpush1.msra.mxu0 0.0
  %77 = vmatprep.subr.mxu0 0.0
  %78 = vmatpush1.msra.mxu0 0.0
  %79 = vmatprep.subr.mxu0 0.0
  %80 = vmatpush1.msra.mxu0 0.0
  %81 = vmatprep.subr.mxu0 0.0
  %82 = vmatpush1.msra.mxu0 0.0
  %83 = vmatprep.subr.mxu0 0.0
  %84 = vmatpush1.msra.mxu0 0.0
  %85 = vmatprep.subr.mxu0 0.0
  %86 = vmatpush1.msra.mxu0 0.0
  %87 = vmatprep.subr.mxu0 0.0
  %88 = vmatpush1.msra.mxu0 0.0
  %89 = vmatprep.subr.mxu0 0.0
  %90 = vmatpush1.msra.mxu0 0.0
  %91 = vmatprep.subr.mxu0 0.0
  %92 = vmatpush1.msra.mxu0 0.0
  %93 = vmatprep.subr.mxu0 0.0
  %94 = vmatpush1.msra.mxu0 0.0
  %95 = vmatprep.subr.mxu0 0.0
  %96 = vmatpush1.msra.mxu0 0.0
  %97 = vmatprep.subr.mxu0 0.0
  %98 = vmatpush1.msra.mxu0 0.0
  %99 = vmatprep.subr.mxu0 0.0
  %100 = vmatpush1.msra.mxu0 0.0
  %101 = vmatprep.subr.mxu0 0.0
  %102 = vmatpush1.msra.mxu0 0.0
  %103 = vmatprep.subr.mxu0 0.0
  %104 = vmatpush1.msra.mxu0 0.0
  %105 = vmatprep.subr.mxu0 0.0
  %106 = vmatpush1.msra.mxu0 0.0
  %107 = vmatprep.subr.mxu0 0.0
  %108 = vmatpush1.msra.mxu0 0.0
  %109 = vmatprep.subr.mxu0 0.0
  %110 = vmatpush1.msra.mxu0 0.0
  %111 = vmatprep.subr.mxu0 0.0
  %112 = vmatpush1.msra.mxu0 0.0
  %113 = vmatprep.subr.mxu0 0.0
  %114 = vmatpush1.msra.mxu0 0.0
  %115 = vmatprep.subr.mxu0 0.0
  %116 = vmatpush1.msra.mxu0 0.0
  %117 = vmatprep.subr.mxu0 0.0
  %118 = vmatpush1.msra.mxu0 0.0
  %119 = vmatprep.subr.mxu0 0.0
  %120 = vmatpush1.msra.mxu0 0.0
  %121 = vmatprep.subr.mxu0 0.0
  %122 = vmatpush1.msra.mxu0 0.0
  %123 = vmatprep.subr.mxu0 0.0
  %124 = vmatpush1.msra.mxu0 0.0
  %125 = vmatprep.mubr.f32.mxu0 0.0
  %126 = vmatmul.mubr.f32.gmra.mrb[0].mxu0 %v50
  %v127 = vpop.f32.mrb[0].mxu0
  %v128 = vadd.f32 %v41, %v127
  %v129 = vpop.f32.mrb[0].mxu0
  %v130 = vadd.f32 %v45, %v129
  %131 = vmatprep.mubr.f32.mxu0 0.0
  %132 = vmatmul.mubr.f32.gmra.mrb[0].mxu0 %v53
  %v133 = vpop.f32.mrb[0].mxu0
  %v134 = vadd.f32 %v41, %v133
  %v135 = vpop.f32.mrb[0].mxu0
  %v136 = vadd.f32 %v45, %v135
  %137 = vmatprep.mubr.f32.mxu0 0.0
  %138 = vmatmul.mubr.f32.gmra.mrb[0].mxu0 %v56
  %v139 = vpop.f32.mrb[0].mxu0
  %v140 = vadd.f32 %v41, %v139
  %v141 = vpop.f32.mrb[0].mxu0
  %v142 = vadd.f32 %v45, %v141
  %143 = vmatprep.mubr.f32.mxu0 0.0
  %144 = vmatmul.mubr.f32.gmra.mrb[0].mxu0 %v59
  %v145 = vpop.f32.mrb[0].mxu0
  %v146 = vadd.f32 %v41, %v145
  %v147 = vpop.f32.mrb[0].mxu0
  %v148 = vadd.f32 %v45, %v147
  %149 = vdwg.mxu0
  %v150 = vmax.f32 %v128, 0.0
  %v151 = vmax.f32 %v134, 0.0
  %v152 = vmax.f32 %v140, 0.0
  %v153 = vmax.f32 %v146, 0.0
  %v154 = vld [vmem:[%s1] sm:$0xff]
  %v155 = vld [vmem:[%s1 + $0x8] sm:$0xff]
  %v156 = vld [vmem:[%s1 + $0x10] sm:$0xff]
  %v157 = vld [vmem:[%s1 + $0x18] sm:$0xff]
  %v158 = vld [vmem:[%s3] sm:$0xff]
  %v159 = vld [vmem:[%s3 + $0x8] sm:$0xff]
  %v160 = vld [vmem:[%s3 + $0x10] sm:$0xff]
  %v161 = vld [vmem:[%s3 + $0x18] sm:$0xff]
  %v162 = vld [vmem:[%s6 + $0x2] sm:$0x1]
  %v164 = vlaneseq
  %v165 = vshrl.u32 %v164, 7
  %v166 = vsub.s32 0, %v165
  %v167 = vrot.slane %v162, %v166
  %vm169 = vcmask 261120
  %v171 = vsel %vm169, %v154, 0
  %v174 = vsel %vm169, %v155, 0
  %v177 = vsel %vm169, %v156, 0
  %v180 = vsel %vm169, %v157, 0
  %182 = vmatprep.subr.mxu0 0.0
  %183 = vmatpush1.msra.mxu0 %v158
  %184 = vmatprep.subr.mxu0 0.0
  %185 = vmatpush1.msra.mxu0 %v159
  %186 = vmatprep.subr.mxu0 0.0
  %187 = vmatpush1.msra.mxu0 %v160
  %188 = vmatprep.subr.mxu0 0.0
  %189 = vmatpush1.msra.mxu0 %v161
  %190 = vmatprep.subr.mxu0 0.0
  %191 = vmatpush1.msra.mxu0 0.0
  %192 = vmatprep.subr.mxu0 0.0
  %193 = vmatpush1.msra.mxu0 0.0
  %194 = vmatprep.subr.mxu0 0.0
  %195 = vmatpush1.msra.mxu0 0.0
  %196 = vmatprep.subr.mxu0 0.0
  %197 = vmatpush1.msra.mxu0 0.0
  %198 = vmatprep.subr.mxu0 0.0
  %199 = vmatpush1.msra.mxu0 0.0
  %200 = vmatprep.subr.mxu0 0.0
  %201 = vmatpush1.msra.mxu0 0.0
  %202 = vmatprep.subr.mxu0 0.0
  %203 = vmatpush1.msra.mxu0 0.0
  %204 = vmatprep.subr.mxu0 0.0
  %205 = vmatpush1.msra.mxu0 0.0
  %206 = vmatprep.subr.mxu0 0.0
  %207 = vmatpush1.msra.mxu0 0.0
  %208 = vmatprep.subr.mxu0 0.0
  %209 = vmatpush1.msra.mxu0 0.0
  %210 = vmatprep.subr.mxu0 0.0
  %211 = vmatpush1.msra.mxu0 0.0
  %212 = vmatprep.subr.mxu0 0.0
  %213 = vmatpush1.msra.mxu0 0.0
  %214 = vmatprep.subr.mxu0 0.0
  %215 = vmatpush1.msra.mxu0 0.0
  %216 = vmatprep.subr.mxu0 0.0
  %217 = vmatpush1.msra.mxu0 0.0
  %218 = vmatprep.subr.mxu0 0.0
  %219 = vmatpush1.msra.mxu0 0.0
  %220 = vmatprep.subr.mxu0 0.0
  %221 = vmatpush1.msra.mxu0 0.0
  %222 = vmatprep.subr.mxu0 0.0
  %223 = vmatpush1.msra.mxu0 0.0
  %224 = vmatprep.subr.mxu0 0.0
  %225 = vmatpush1.msra.mxu0 0.0
  %226 = vmatprep.subr.mxu0 0.0
  %227 = vmatpush1.msra.mxu0 0.0
  %228 = vmatprep.subr.mxu0 0.0
  %229 = vmatpush1.msra.mxu0 0.0
  %230 = vmatprep.subr.mxu0 0.0
  %231 = vmatpush1.msra.mxu0 0.0
  %232 = vmatprep.subr.mxu0 0.0
  %233 = vmatpush1.msra.mxu0 0.0
  %234 = vmatprep.subr.mxu0 0.0
  %235 = vmatpush1.msra.mxu0 0.0
  %236 = vmatprep.subr.mxu0 0.0
  %237 = vmatpush1.msra.mxu0 0.0
  %238 = vmatprep.subr.mxu0 0.0
  %239 = vmatpush1.msra.mxu0 0.0
  %240 = vmatprep.subr.mxu0 0.0
  %241 = vmatpush1.msra.mxu0 0.0
  %242 = vmatprep.subr.mxu0 0.0
  %243 = vmatpush1.msra.mxu0 0.0
  %244 = vmatprep.subr.mxu0 0.0
  %245 = vmatpush1.msra.mxu0 0.0
  %246 = vmatprep.mubr.f32.mxu0 0.0
  %247 = vmatmul.mubr.f32.gmra.mrb[0].mxu0 %v171
  %v248 = vpop.f32.mrb[0].mxu0
  %v249 = vadd.f32 %v167, %v248
  %v250 = vpop.f32.mrb[0].mxu0
  %251 = vmatprep.mubr.f32.mxu0 0.0
  %252 = vmatmul.mubr.f32.gmra.mrb[0].mxu0 %v174
  %v253 = vpop.f32.mrb[0].mxu0
  %v254 = vadd.f32 %v167, %v253
  %v255 = vpop.f32.mrb[0].mxu0
  %256 = vmatprep.mubr.f32.mxu0 0.0
  %257 = vmatmul.mubr.f32.gmra.mrb[0].mxu0 %v177
  %v258 = vpop.f32.mrb[0].mxu0
  %v259 = vadd.f32 %v167, %v258
  %v260 = vpop.f32.mrb[0].mxu0
  %261 = vmatprep.mubr.f32.mxu0 0.0
  %262 = vmatmul.mubr.f32.gmra.mrb[0].mxu0 %v180
  %v263 = vpop.f32.mrb[0].mxu0
  %v264 = vadd.f32 %v167, %v263
  %v265 = vpop.f32.mrb[0].mxu0
  %266 = vdwg.mxu0
  %v267 = vmax.f32 %v249, 0.0
  %v268 = vmax.f32 %v254, 0.0
  %v269 = vmax.f32 %v259, 0.0
  %v270 = vmax.f32 %v264, 0.0
  %vm271 = vcmp.ne.f32.partialorder %v249, %v249
  %vm272 = vcmp.ne.f32.partialorder %v254, %v254
  %vm273 = vcmp.ne.f32.partialorder %v259, %v259
  %vm274 = vcmp.ne.f32.partialorder %v264, %v264
  %v275 = vadd.f32 %v249, 0.0
  %v276 = vadd.f32 %v254, 0.0
  %v277 = vadd.f32 %v259, 0.0
  %v278 = vadd.f32 %v264, 0.0
  %v279 = vand.u32 2147483647, %v249
  %v280 = vand.u32 2147483647, %v254
  %v281 = vand.u32 2147483647, %v259
  %v282 = vand.u32 2147483647, %v264
  %v283 = vsub.f32 0.0, %v279
  %v284 = vsub.f32 0.0, %v280
  %v285 = vsub.f32 0.0, %v281
  %v286 = vsub.f32 0.0, %v282
  %v287 = vmul.f32 %v283, 1.442695
  %v288 = vpow.pop %v287
  %v289 = vmul.f32 %v284, 1.442695
  %v290 = vpow.pop %v289
  %v291 = vmul.f32 %v285, 1.442695
  %v292 = vpow.pop %v291
  %v293 = vmul.f32 %v286, 1.442695
  %v294 = vpow.pop %v293
  %v295 = vadd.f32 %v288, 1.0
  %v296 = vlog2.pop %v295
  %v297 = vmul.f32 %v296, 0.6931472
  %v298 = vmul.f32 -0.5, %v288
  %v299 = vadd.f32 %v298, 1.0
  %v300 = vmul.f32 %v299, %v288
  %v301 = vand.u32 2147483647, %v288
  %vm302 = vcmp.lt.f32.partialorder %v301, 0.0004427343
  %v303 = vsel %vm302, %v300, %v297
  %v304 = vadd.f32 %v290, 1.0
  %v305 = vlog2.pop %v304
  %v306 = vmul.f32 %v305, 0.6931472
  %v307 = vmul.f32 -0.5, %v290
  %v308 = vadd.f32 %v307, 1.0
  %v309 = vmul.f32 %v308, %v290
  %v310 = vand.u32 2147483647, %v290
  %vm311 = vcmp.lt.f32.partialorder %v310, 0.0004427343
  %v312 = vsel %vm311, %v309, %v306
  %v313 = vadd.f32 %v292, 1.0
  %v314 = vlog2.pop %v313
  %v315 = vmul.f32 %v314, 0.6931472
  %v316 = vmul.f32 -0.5, %v292
  %v317 = vadd.f32 %v316, 1.0
  %v318 = vmul.f32 %v317, %v292
  %v319 = vand.u32 2147483647, %v292
  %vm320 = vcmp.lt.f32.partialorder %v319, 0.0004427343
  %v321 = vsel %vm320, %v318, %v315
  %v322 = vadd.f32 %v294, 1.0
  %v323 = vlog2.pop %v322
  %v324 = vmul.f32 %v323, 0.6931472
  %v325 = vmul.f32 -0.5, %v294
  %v326 = vadd.f32 %v325, 1.0
  %v327 = vmul.f32 %v326, %v294
  %v328 = vand.u32 2147483647, %v294
  %vm329 = vcmp.lt.f32.partialorder %v328, 0.0004427343
  %v330 = vsel %vm329, %v327, %v324
  %v331 = vadd.f32 %v267, %v303
  %v332 = vadd.f32 %v268, %v312
  %v333 = vadd.f32 %v269, %v321
  %v334 = vadd.f32 %v270, %v330
  %v335 = vsel %vm271, %v275, %v331
  %v336 = vsel %vm272, %v276, %v332
  %v337 = vsel %vm273, %v277, %v333
  %v338 = vsel %vm274, %v278, %v334
  %v339 = vtanh.pop %v335
  %v340 = vtanh.pop %v336
  %v341 = vtanh.pop %v337
  %v342 = vtanh.pop %v338
  %v343 = vmul.f32 %v249, %v339
  %v344 = vmul.f32 %v254, %v340
  %v345 = vmul.f32 %v259, %v341
  %v346 = vmul.f32 %v264, %v342
  %v347 = vld [vmem:[%s3 + $0x20] sm:$0xff]
  %v348 = vld [vmem:[%s3 + $0x28] sm:$0xff]
  %v349 = vld [vmem:[%s3 + $0x30] sm:$0xff]
  %v350 = vld [vmem:[%s3 + $0x38] sm:$0xff]
  %v351 = vld [vmem:[%s3 + $0x40] sm:$0xff]
  %v352 = vld [vmem:[%s3 + $0x48] sm:$0xff]
  %v353 = vld [vmem:[%s3 + $0x50] sm:$0xff]
  %v354 = vld [vmem:[%s3 + $0x58] sm:$0xff]
  %v355 = vld [vmem:[%s3 + $0x60] sm:$0xff]
  %v356 = vld [vmem:[%s3 + $0x68] sm:$0xff]
  %v357 = vld [vmem:[%s3 + $0x70] sm:$0xff]
  %v358 = vld [vmem:[%s3 + $0x78] sm:$0xff]
  %v359 = vld [vmem:[%s3 + $0x80] sm:$0xff]
  %v360 = vld [vmem:[%s3 + $0x88] sm:$0xff]
  %v361 = vld [vmem:[%s3 + $0x90] sm:$0xff]
  %v362 = vld [vmem:[%s3 + $0x98] sm:$0xff]
  %v363 = vld [vmem:[%s6 + $0x3] sm:$0x1]
  %v365 = vlaneseq
  %v366 = vshrl.u32 %v365, 7
  %v367 = vsub.s32 0, %v366
  %v368 = vrot.slane %v363, %v367
  %370 = vmatprep.subr.mxu0 0.0
  %371 = vmatpush1.msra.mxu0 %v347
  %372 = vmatprep.subr.mxu0 0.0
  %373 = vmatpush1.msra.mxu0 %v348
  %374 = vmatprep.subr.mxu0 0.0
  %375 = vmatpush1.msra.mxu0 %v349
  %376 = vmatprep.subr.mxu0 0.0
  %377 = vmatpush1.msra.mxu0 %v350
  %378 = vmatprep.subr.mxu0 0.0
  %379 = vmatpush1.msra.mxu0 %v351
  %380 = vmatprep.subr.mxu0 0.0
  %381 = vmatpush1.msra.mxu0 %v352
  %382 = vmatprep.subr.mxu0 0.0
  %383 = vmatpush1.msra.mxu0 %v353
  %384 = vmatprep.subr.mxu0 0.0
  %385 = vmatpush1.msra.mxu0 %v354
  %386 = vmatprep.subr.mxu0 0.0
  %387 = vmatpush1.msra.mxu0 %v355
  %388 = vmatprep.subr.mxu0 0.0
  %389 = vmatpush1.msra.mxu0 %v356
  %390 = vmatprep.subr.mxu0 0.0
  %391 = vmatpush1.msra.mxu0 %v357
  %392 = vmatprep.subr.mxu0 0.0
  %393 = vmatpush1.msra.mxu0 %v358
  %394 = vmatprep.subr.mxu0 0.0
  %395 = vmatpush1.msra.mxu0 %v359
  %396 = vmatprep.subr.mxu0 0.0
  %397 = vmatpush1.msra.mxu0 %v360
  %398 = vmatprep.subr.mxu0 0.0
  %399 = vmatpush1.msra.mxu0 %v361
  %400 = vmatprep.subr.mxu0 0.0
  %401 = vmatpush1.msra.mxu0 %v362
  %402 = vmatprep.subr.mxu0 0.0
  %403 = vmatpush1.msra.mxu0 0.0
  %404 = vmatprep.subr.mxu0 0.0
  %405 = vmatpush1.msra.mxu0 0.0
  %406 = vmatprep.subr.mxu0 0.0
  %407 = vmatpush1.msra.mxu0 0.0
  %408 = vmatprep.subr.mxu0 0.0
  %409 = vmatpush1.msra.mxu0 0.0
  %410 = vmatprep.subr.mxu0 0.0
  %411 = vmatpush1.msra.mxu0 0.0
  %412 = vmatprep.subr.mxu0 0.0
  %413 = vmatpush1.msra.mxu0 0.0
  %414 = vmatprep.subr.mxu0 0.0
  %415 = vmatpush1.msra.mxu0 0.0
  %416 = vmatprep.subr.mxu0 0.0
  %417 = vmatpush1.msra.mxu0 0.0
  %418 = vmatprep.subr.mxu0 0.0
  %419 = vmatpush1.msra.mxu0 0.0
  %420 = vmatprep.subr.mxu0 0.0
  %421 = vmatpush1.msra.mxu0 0.0
  %422 = vmatprep.subr.mxu0 0.0
  %423 = vmatpush1.msra.mxu0 0.0
  %424 = vmatprep.subr.mxu0 0.0
  %425 = vmatpush1.msra.mxu0 0.0
  %426 = vmatprep.subr.mxu0 0.0
  %427 = vmatpush1.msra.mxu0 0.0
  %428 = vmatprep.subr.mxu0 0.0
  %429 = vmatpush1.msra.mxu0 0.0
  %430 = vmatprep.subr.mxu0 0.0
  %431 = vmatpush1.msra.mxu0 0.0
  %432 = vmatprep.subr.mxu0 0.0
  %433 = vmatpush1.msra.mxu0 0.0
  %434 = vmatprep.mubr.f32.mxu0 0.0
  %435 = vmatmul.mubr.f32.gmra.mrb[0].mxu0 %v343
  %v436 = vpop.f32.mrb[0].mxu0
  %v437 = vadd.f32 %v368, %v436
  %v438 = vpop.f32.mrb[0].mxu0
  %439 = vmatprep.mubr.f32.mxu0 0.0
  %440 = vmatmul.mubr.f32.gmra.mrb[0].mxu0 %v344
  %v441 = vpop.f32.mrb[0].mxu0
  %v442 = vadd.f32 %v368, %v441
  %v443 = vpop.f32.mrb[0].mxu0
  %444 = vmatprep.mubr.f32.mxu0 0.0
  %445 = vmatmul.mubr.f32.gmra.mrb[0].mxu0 %v345
  %v446 = vpop.f32.mrb[0].mxu0
  %v447 = vadd.f32 %v368, %v446
  %v448 = vpop.f32.mrb[0].mxu0
  %449 = vmatprep.mubr.f32.mxu0 0.0
  %450 = vmatmul.mubr.f32.gmra.mrb[0].mxu0 %v346
  %v451 = vpop.f32.mrb[0].mxu0
  %v452 = vadd.f32 %v368, %v451
  %v453 = vpop.f32.mrb[0].mxu0
  %454 = vdwg.mxu0
  %v455 = vsel %vm169, %v437, %v154
  %v456 = vsel %vm169, %v442, %v155
  %v457 = vsel %vm169, %v447, %v156
  %v458 = vsel %vm169, %v452, %v157
  %v459 = vld [vmem:[%s3 + $0xa0] sm:$0xff]
  %v460 = vld [vmem:[%s3 + $0xa8] sm:$0xff]
  %v461 = vld [vmem:[%s3 + $0xb0] sm:$0xff]
  %v462 = vld [vmem:[%s3 + $0xb8] sm:$0xff]
  %v463 = vld [vmem:[%s3 + $0xc0] sm:$0xff]
  %v464 = vld [vmem:[%s3 + $0xc8] sm:$0xff]
  %v465 = vld [vmem:[%s6 + $0x4] sm:$0x1]
  %v467 = vlaneseq
  %v468 = vshrl.u32 %v467, 7
  %v469 = vsub.s32 0, %v468
  %v470 = vrot.slane %v465, %v469
  %vm472 = vcmask 392192
  %v474 = vsel %vm472, %v455, 0
  %v477 = vsel %vm472, %v456, 0
  %v480 = vsel %vm472, %v457, 0
  %v483 = vsel %vm472, %v458, 0
  %485 = vmatprep.subr.mxu0 0.0
  %486 = vmatpush1.msra.mxu0 %v459
  %487 = vmatprep.subr.mxu0 0.0
  %488 = vmatpush1.msra.mxu0 %v460
  %489 = vmatprep.subr.mxu0 0.0
  %490 = vmatpush1.msra.mxu0 %v461
  %491 = vmatprep.subr.mxu0 0.0
  %492 = vmatpush1.msra.mxu0 %v462
  %493 = vmatprep.subr.mxu0 0.0
  %494 = vmatpush1.msra.mxu0 %v463
  %495 = vmatprep.subr.mxu0 0.0
  %496 = vmatpush1.msra.mxu0 %v464
  %497 = vmatprep.subr.mxu0 0.0
  %498 = vmatpush1.msra.mxu0 0.0
  %499 = vmatprep.subr.mxu0 0.0
  %500 = vmatpush1.msra.mxu0 0.0
  %501 = vmatprep.subr.mxu0 0.0
  %502 = vmatpush1.msra.mxu0 0.0
  %503 = vmatprep.subr.mxu0 0.0
  %504 = vmatpush1.msra.mxu0 0.0
  %505 = vmatprep.subr.mxu0 0.0
  %506 = vmatpush1.msra.mxu0 0.0
  %507 = vmatprep.subr.mxu0 0.0
  %508 = vmatpush1.msra.mxu0 0.0
  %509 = vmatprep.subr.mxu0 0.0
  %510 = vmatpush1.msra.mxu0 0.0
  %511 = vmatprep.subr.mxu0 0.0
  %512 = vmatpush1.msra.mxu0 0.0
  %513 = vmatprep.subr.mxu0 0.0
  %514 = vmatpush1.msra.mxu0 0.0
  %515 = vmatprep.subr.mxu0 0.0
  %516 = vmatpush1.msra.mxu0 0.0
  %517 = vmatprep.subr.mxu0 0.0
  %518 = vmatpush1.msra.mxu0 0.0
  %519 = vmatprep.subr.mxu0 0.0
  %520 = vmatpush1.msra.mxu0 0.0
  %521 = vmatprep.subr.mxu0 0.0
  %522 = vmatpush1.msra.mxu0 0.0
  %523 = vmatprep.subr.mxu0 0.0
  %524 = vmatpush1.msra.mxu0 0.0
  %525 = vmatprep.subr.mxu0 0.0
  %526 = vmatpush1.msra.mxu0 0.0
  %527 = vmatprep.subr.mxu0 0.0
  %528 = vmatpush1.msra.mxu0 0.0
  %529 = vmatprep.subr.mxu0 0.0
  %530 = vmatpush1.msra.mxu0 0.0
  %531 = vmatprep.subr.mxu0 0.0
  %532 = vmatpush1.msra.mxu0 0.0
  %533 = vmatprep.subr.mxu0 0.0
  %534 = vmatpush1.msra.mxu0 0.0
  %535 = vmatprep.subr.mxu0 0.0
  %536 = vmatpush1.msra.mxu0 0.0
  %537 = vmatprep.subr.mxu0 0.0
  %538 = vmatpush1.msra.mxu0 0.0
  %539 = vmatprep.subr.mxu0 0.0
  %540 = vmatpush1.msra.mxu0 0.0
  %541 = vmatprep.subr.mxu0 0.0
  %542 = vmatpush1.msra.mxu0 0.0
  %543 = vmatprep.subr.mxu0 0.0
  %544 = vmatpush1.msra.mxu0 0.0
  %545 = vmatprep.subr.mxu0 0.0
  %546 = vmatpush1.msra.mxu0 0.0
  %547 = vmatprep.subr.mxu0 0.0
  %548 = vmatpush1.msra.mxu0 0.0
  %549 = vmatprep.mubr.f32.mxu0 0.0
  %550 = vmatmul.mubr.f32.gmra.mrb[0].mxu0 %v474
  %v551 = vpop.f32.mrb[0].mxu0
  %v552 = vadd.f32 %v470, %v551
  %v553 = vpop.f32.mrb[0].mxu0
  %554 = vmatprep.mubr.f32.mxu0 0.0
  %555 = vmatmul.mubr.f32.gmra.mrb[0].mxu0 %v477
  %v556 = vpop.f32.mrb[0].mxu0
  %v557 = vadd.f32 %v470, %v556
  %v558 = vpop.f32.mrb[0].mxu0
  %559 = vmatprep.mubr.f32.mxu0 0.0
  %560 = vmatmul.mubr.f32.gmra.mrb[0].mxu0 %v480
  %v561 = vpop.f32.mrb[0].mxu0
  %v562 = vadd.f32 %v470, %v561
  %v563 = vpop.f32.mrb[0].mxu0
  %564 = vmatprep.mubr.f32.mxu0 0.0
  %565 = vmatmul.mubr.f32.gmra.mrb[0].mxu0 %v483
  %v566 = vpop.f32.mrb[0].mxu0
  %v567 = vadd.f32 %v470, %v566
  %v568 = vpop.f32.mrb[0].mxu0
  %569 = vdwg.mxu0
  %v570 = vadd.f32 %v130, %v552
  %v571 = vadd.f32 %v136, %v557
  %v572 = vadd.f32 %v142, %v562
  %v573 = vadd.f32 %v148, %v567
  %v574 = vlaneseq
  %v575 = vshrl.u32 %v574, 7
  %v576 = vadd.s32 %v575, 8
  %v577 = vadd.s32 %v575, 16
  %v578 = vadd.s32 %v575, 24
  %vm579 = vcmp.lt.s32.totalorder %v575, 0
  %v580 = vsub.s32 0, %v575
  %v581 = vsel %vm579, %v580, %v575
  %v582 = vshrl.u32 %v581, 4
  %v583 = vand.u32 %v581, 15
  %v584 = vsub.s32 0, %v583
  %v585 = vsel %vm579, %v584, %v583
  %vm586 = vcmp.lt.s32.totalorder %v576, 0
  %v587 = vsub.s32 0, %v576
  %v588 = vsel %vm586, %v587, %v576
  %v589 = vshrl.u32 %v588, 4
  %v590 = vand.u32 %v588, 15
  %v591 = vsub.s32 0, %v590
  %v592 = vsel %vm586, %v591, %v590
  %vm593 = vcmp.lt.s32.totalorder %v577, 0
  %v594 = vsub.s32 0, %v577
  %v595 = vsel %vm593, %v594, %v577
  %v596 = vshrl.u32 %v595, 4
  %v597 = vand.u32 %v595, 15
  %v598 = vsub.s32 0, %v597
  %v599 = vsel %vm593, %v598, %v597
  %vm600 = vcmp.lt.s32.totalorder %v578, 0
  %v601 = vsub.s32 0, %v578
  %v602 = vsel %vm600, %v601, %v578
  %v603 = vshrl.u32 %v602, 4
  %v604 = vand.u32 %v602, 15
  %v605 = vsub.s32 0, %v604
  %v606 = vsel %vm600, %v605, %v604
  %vm607 = vcmp.ne.s32.totalorder %v585, 0
  %vm608 = vcmp.ne.s32.totalorder %v592, 0
  %vm609 = vcmp.ne.s32.totalorder %v599, 0
  %vm610 = vcmp.ne.s32.totalorder %v606, 0
  %vm611 = vcmp.lt.s32.totalorder %v585, 0
  %vm612 = vcmp.lt.s32.totalorder %v592, 0
  %vm613 = vcmp.lt.s32.totalorder %v599, 0
  %vm614 = vcmp.lt.s32.totalorder %v606, 0
  %vm615 = vmand %vm611, %vm607
  %vm616 = vmand %vm612, %vm608
  %vm617 = vmand %vm613, %vm609
  %vm618 = vmand %vm614, %vm610
  %v619 = vadd.s32 %v585, 16
  %v620 = vadd.s32 %v592, 16
  %v621 = vadd.s32 %v599, 16
  %v622 = vadd.s32 %v606, 16
  %v623 = vsel %vm615, %v619, %v585
  %v624 = vsel %vm616, %v620, %v592
  %v625 = vsel %vm617, %v621, %v599
  %v626 = vsel %vm618, %v622, %v606
  %vm627 = vcmp.ne.s32.totalorder %v623, 0
  %vm628 = vcmp.ne.s32.totalorder %v624, 0
  %vm629 = vcmp.ne.s32.totalorder %v625, 0
  %vm630 = vcmp.ne.s32.totalorder %v626, 0
  %v631 = vsel %vm627, 1, 0
  %v632 = vsel %vm628, 1, 0
  %v633 = vsel %vm629, 1, 0
  %v634 = vsel %vm630, 1, 0
  %v635 = vcvt.s32.f32 %v631
  %v636 = vcvt.s32.f32 %v632
  %v637 = vcvt.s32.f32 %v633
  %v638 = vcvt.s32.f32 %v634
  %vm639 = vcmp.ne.s32.totalorder %v623, 15
  %vm640 = vcmp.ne.s32.totalorder %v624, 15
  %vm641 = vcmp.ne.s32.totalorder %v625, 15
  %vm642 = vcmp.ne.s32.totalorder %v626, 15
  %v643 = vsel %vm639, 1, 0
  %v644 = vsel %vm640, 1, 0
  %v645 = vsel %vm641, 1, 0
  %v646 = vsel %vm642, 1, 0
  %v647 = vcvt.s32.f32 %v643
  %v648 = vcvt.s32.f32 %v644
  %v649 = vcvt.s32.f32 %v645
  %v650 = vcvt.s32.f32 %v646
  %v651 = vadd.f32 %v150, %v570
  %v652 = vadd.f32 %v151, %v571
  %v653 = vadd.f32 %v152, %v572
  %v654 = vadd.f32 %v153, %v573
  %v655 = vrot.slane %v651, 7
  %v656 = vrot.slane %v652, 7
  %v657 = vrot.slane %v653, 7
  %v658 = vrot.slane %v654, 7
  %vm659 = vcmp.lt.s32.totalorder %v575, 1
  %v660 = vsel %vm659, %v657, %v658
  %v661 = vsel %vm659, %v656, %v657
  %v662 = vsel %vm659, %v655, %v656
  %v663 = vsel %vm659, %v658, %v655
  %v664 = vmul.f32 %v663, %v635
  %v665 = vmul.f32 %v662, %v636
  %v666 = vmul.f32 %v661, %v637
  %v667 = vmul.f32 %v660, %v638
  %v668 = vrot.slane %v651, 1
  %v669 = vrot.slane %v652, 1
  %v670 = vrot.slane %v653, 1
  %v671 = vrot.slane %v654, 1
  %vm672 = vcmp.lt.s32.totalorder %v575, 7
  %v673 = vsel %vm672, %v670, %v671
  %v674 = vsel %vm672, %v669, %v670
  %v675 = vsel %vm672, %v668, %v669
  %v676 = vsel %vm672, %v671, %v668
  %v677 = vmul.f32 %v675, %v647
  %v678 = vmul.f32 %v674, %v648
  %v679 = vmul.f32 %v673, %v649
  %v680 = vmul.f32 %v676, %v650
  %685 = vrot.lane.b32.xlu0 %v651, 32
  %v686 = vpop.permute.xlu0 %685
  %687 = vrot.lane.b32.xlu0 %v652, 32
  %v688 = vpop.permute.xlu0 %687
  %689 = vrot.lane.b32.xlu0 %v653, 32
  %v690 = vpop.permute.xlu0 %689
  %691 = vrot.lane.b32.xlu0 %v654, 32
  %v692 = vpop.permute.xlu0 %691
  %701 = vrot.lane.b32.xlu0 %v677, 64
  %v702 = vpop.permute.xlu0 %701
  %703 = vrot.lane.b32.xlu0 %v678, 64
  %v704 = vpop.permute.xlu0 %703
  %705 = vrot.lane.b32.xlu0 %v679, 64
  %v706 = vpop.permute.xlu0 %705
  %707 = vrot.lane.b32.xlu0 %v680, 64
  %v708 = vpop.permute.xlu0 %707
  %v713 = vsel %vm169, %v664, %v686
  %v714 = vsel %vm169, %v665, %v688
  %v715 = vsel %vm169, %v666, %v690
  %v716 = vsel %vm169, %v667, %v692
  %vm717 = vcmask 523264
  %v718 = vsel %vm717, %v713, %v702
  %v719 = vsel %vm717, %v714, %v704
  %v720 = vsel %vm717, %v715, %v706
  %v721 = vsel %vm717, %v716, %v708
  %v722 = vld [vmem:[%s4] sm:$0xff]
  %v723 = vld [vmem:[%s4 + $0x20] sm:$0xff]
  %v724 = vld [vmem:[%s4 + $0x40] sm:$0xff]
  %v725 = vld [vmem:[%s4 + $0x60] sm:$0xff]
  %v726 = vld [vmem:[%s4 + $0x80] sm:$0xff]
  %v727 = vld [vmem:[%s4 + $0xa0] sm:$0xff]
  %v728 = vld [vmem:[%s4 + $0xc0] sm:$0xff]
  %v729 = vld [vmem:[%s4 + $0xe0] sm:$0xff]
  %v730 = vld [vmem:[%s4 + $0x100] sm:$0xff]
  %v731 = vld [vmem:[%s4 + $0x120] sm:$0xff]
  %v732 = vld [vmem:[%s4 + $0x140] sm:$0xff]
  %v733 = vld [vmem:[%s4 + $0x160] sm:$0xff]
  %v734 = vld [vmem:[%s6 + $0x5] sm:$0x1]
  %v736 = vlaneseq
  %v737 = vshrl.u32 %v736, 7
  %v738 = vsub.s32 0, %v737
  %v739 = vrot.slane %v734, %v738
  %vm741 = vcmask 785408
  %v743 = vsel %vm741, %v718, 0
  %v746 = vsel %vm741, %v719, 0
  %v749 = vsel %vm741, %v720, 0
  %v752 = vsel %vm741, %v721, 0
  %754 = vmatprep.subr.mxu0 0.0
  %755 = vmatpush1.msra.mxu0 %v722
  %756 = vmatprep.subr.mxu0 0.0
  %757 = vmatpush1.msra.mxu0 %v723
  %758 = vmatprep.subr.mxu0 0.0
  %759 = vmatpush1.msra.mxu0 %v724
  %760 = vmatprep.subr.mxu0 0.0
  %761 = vmatpush1.msra.mxu0 %v725
  %762 = vmatprep.subr.mxu0 0.0
  %763 = vmatpush1.msra.mxu0 %v726
  %764 = vmatprep.subr.mxu0 0.0
  %765 = vmatpush1.msra.mxu0 %v727
  %766 = vmatprep.subr.mxu0 0.0
  %767 = vmatpush1.msra.mxu0 %v728
  %768 = vmatprep.subr.mxu0 0.0
  %769 = vmatpush1.msra.mxu0 %v729
  %770 = vmatprep.subr.mxu0 0.0
  %771 = vmatpush1.msra.mxu0 %v730
  %772 = vmatprep.subr.mxu0 0.0
  %773 = vmatpush1.msra.mxu0 %v731
  %774 = vmatprep.subr.mxu0 0.0
  %775 = vmatpush1.msra.mxu0 %v732
  %776 = vmatprep.subr.mxu0 0.0
  %777 = vmatpush1.msra.mxu0 %v733
  %778 = vmatprep.subr.mxu0 0.0
  %779 = vmatpush1.msra.mxu0 0.0
  %780 = vmatprep.subr.mxu0 0.0
  %781 = vmatpush1.msra.mxu0 0.0
  %782 = vmatprep.subr.mxu0 0.0
  %783 = vmatpush1.msra.mxu0 0.0
  %784 = vmatprep.subr.mxu0 0.0
  %785 = vmatpush1.msra.mxu0 0.0
  %786 = vmatprep.subr.mxu0 0.0
  %787 = vmatpush1.msra.mxu0 0.0
  %788 = vmatprep.subr.mxu0 0.0
  %789 = vmatpush1.msra.mxu0 0.0
  %790 = vmatprep.subr.mxu0 0.0
  %791 = vmatpush1.msra.mxu0 0.0
  %792 = vmatprep.subr.mxu0 0.0
  %793 = vmatpush1.msra.mxu0 0.0
  %794 = vmatprep.subr.mxu0 0.0
  %795 = vmatpush1.msra.mxu0 0.0
  %796 = vmatprep.subr.mxu0 0.0
  %797 = vmatpush1.msra.mxu0 0.0
  %798 = vmatprep.subr.mxu0 0.0
  %799 = vmatpush1.msra.mxu0 0.0
  %800 = vmatprep.subr.mxu0 0.0
  %801 = vmatpush1.msra.mxu0 0.0
  %802 = vmatprep.subr.mxu0 0.0
  %803 = vmatpush1.msra.mxu0 0.0
  %804 = vmatprep.subr.mxu0 0.0
  %805 = vmatpush1.msra.mxu0 0.0
  %806 = vmatprep.subr.mxu0 0.0
  %807 = vmatpush1.msra.mxu0 0.0
  %808 = vmatprep.subr.mxu0 0.0
  %809 = vmatpush1.msra.mxu0 0.0
  %810 = vmatprep.subr.mxu0 0.0
  %811 = vmatpush1.msra.mxu0 0.0
  %812 = vmatprep.subr.mxu0 0.0
  %813 = vmatpush1.msra.mxu0 0.0
  %814 = vmatprep.subr.mxu0 0.0
  %815 = vmatpush1.msra.mxu0 0.0
  %816 = vmatprep.subr.mxu0 0.0
  %817 = vmatpush1.msra.mxu0 0.0
  %818 = vmatprep.mubr.f32.mxu0 0.0
  %819 = vmatmul.mubr.f32.gmra.mrb[0].mxu0 %v743
  %v820 = vpop.f32.mrb[0].mxu0
  %v821 = vadd.f32 %v739, %v820
  %v822 = vpop.f32.mrb[0].mxu0
  %823 = vmatprep.mubr.f32.mxu0 0.0
  %824 = vmatmul.mubr.f32.gmra.mrb[0].mxu0 %v746
  %v825 = vpop.f32.mrb[0].mxu0
  %v826 = vadd.f32 %v739, %v825
  %v827 = vpop.f32.mrb[0].mxu0
  %828 = vmatprep.mubr.f32.mxu0 0.0
  %829 = vmatmul.mubr.f32.gmra.mrb[0].mxu0 %v749
  %v830 = vpop.f32.mrb[0].mxu0
  %v831 = vadd.f32 %v739, %v830
  %v832 = vpop.f32.mrb[0].mxu0
  %833 = vmatprep.mubr.f32.mxu0 0.0
  %834 = vmatmul.mubr.f32.gmra.mrb[0].mxu0 %v752
  %v835 = vpop.f32.mrb[0].mxu0
  %v836 = vadd.f32 %v739, %v835
  %v837 = vpop.f32.mrb[0].mxu0
  %838 = vdwg.mxu0
  %v839 = vxor.u32 %v821, 2147483648
  %v840 = vxor.u32 %v826, 2147483648
  %v841 = vxor.u32 %v831, 2147483648
  %v842 = vxor.u32 %v836, 2147483648
  %v843 = vmul.f32 %v839, 1.442695
  %v844 = vpow.pop %v843
  %v845 = vmul.f32 %v840, 1.442695
  %v846 = vpow.pop %v845
  %v847 = vmul.f32 %v841, 1.442695
  %v848 = vpow.pop %v847
  %v849 = vmul.f32 %v842, 1.442695
  %v850 = vpow.pop %v849
  %v851 = vadd.f32 %v844, 1.0
  %v852 = vadd.f32 %v846, 1.0
  %v853 = vadd.f32 %v848, 1.0
  %v854 = vadd.f32 %v850, 1.0
  %v855 = vrcp.pop %v851
  %v856 = vmul.f32 1.0, %v855
  %v857 = vrcp.pop %v852
  %v858 = vmul.f32 1.0, %v857
  %v859 = vrcp.pop %v853
  %v860 = vmul.f32 1.0, %v859
  %v861 = vrcp.pop %v854
  %v862 = vmul.f32 1.0, %v861
  %v863 = vtanh.pop %v821
  %v864 = vtanh.pop %v826
  %v865 = vtanh.pop %v831
  %v866 = vtanh.pop %v836
  %871 = vrot.lane.b32.xlu0 %v863, 96
  %v872 = vpop.permute.xlu0 %871
  %873 = vrot.lane.b32.xlu0 %v864, 96
  %v874 = vpop.permute.xlu0 %873
  %875 = vrot.lane.b32.xlu0 %v865, 96
  %v876 = vpop.permute.xlu0 %875
  %877 = vrot.lane.b32.xlu0 %v866, 96
  %v878 = vpop.permute.xlu0 %877
  %v883 = vmul.f32 %v856, %v872
  %v884 = vmul.f32 %v858, %v874
  %v885 = vmul.f32 %v860, %v876
  %v886 = vmul.f32 %v862, %v878
  %v887 = vld [vmem:[%s5] sm:$0xff]
  %v888 = vld [vmem:[%s5 + $0x30] sm:$0xff]
  %v889 = vld [vmem:[%s5 + $0x60] sm:$0xff]
  %v890 = vld [vmem:[%s5 + $0x90] sm:$0xff]
  %v891 = vld [vmem:[%s6 + $0x9] sm:$0x1]
  %v893 = vlaneseq
  %v894 = vshrl.u32 %v893, 7
  %v895 = vsub.s32 0, %v894
  %v896 = vrot.slane %v891, %v895
  %v899 = vsel %vm169, %v883, 0
  %v902 = vsel %vm169, %v884, 0
  %v905 = vsel %vm169, %v885, 0
  %v908 = vsel %vm169, %v886, 0
  %910 = vmatprep.subr.mxu0 0.0
  %911 = vmatpush1.msra.mxu0 %v887
  %912 = vmatprep.subr.mxu0 0.0
  %913 = vmatpush1.msra.mxu0 %v888
  %914 = vmatprep.subr.mxu0 0.0
  %915 = vmatpush1.msra.mxu0 %v889
  %916 = vmatprep.subr.mxu0 0.0
  %917 = vmatpush1.msra.mxu0 %v890
  %918 = vmatprep.subr.mxu0 0.0
  %919 = vmatpush1.msra.mxu0 0.0
  %920 = vmatprep.subr.mxu0 0.0
  %921 = vmatpush1.msra.mxu0 0.0
  %922 = vmatprep.subr.mxu0 0.0
  %923 = vmatpush1.msra.mxu0 0.0
  %924 = vmatprep.subr.mxu0 0.0
  %925 = vmatpush1.msra.mxu0 0.0
  %926 = vmatprep.subr.mxu0 0.0
  %927 = vmatpush1.msra.mxu0 0.0
  %928 = vmatprep.subr.mxu0 0.0
  %929 = vmatpush1.msra.mxu0 0.0
  %930 = vmatprep.subr.mxu0 0.0
  %931 = vmatpush1.msra.mxu0 0.0
  %932 = vmatprep.subr.mxu0 0.0
  %933 = vmatpush1.msra.mxu0 0.0
  %934 = vmatprep.subr.mxu0 0.0
  %935 = vmatpush1.msra.mxu0 0.0
  %936 = vmatprep.subr.mxu0 0.0
  %937 = vmatpush1.msra.mxu0 0.0
  %938 = vmatprep.subr.mxu0 0.0
  %939 = vmatpush1.msra.mxu0 0.0
  %940 = vmatprep.subr.mxu0 0.0
  %941 = vmatpush1.msra.mxu0 0.0
  %942 = vmatprep.subr.mxu0 0.0
  %943 = vmatpush1.msra.mxu0 0.0
  %944 = vmatprep.subr.mxu0 0.0
  %945 = vmatpush1.msra.mxu0 0.0
  %946 = vmatprep.subr.mxu0 0.0
  %947 = vmatpush1.msra.mxu0 0.0
  %948 = vmatprep.subr.mxu0 0.0
  %949 = vmatpush1.msra.mxu0 0.0
  %950 = vmatprep.subr.mxu0 0.0
  %951 = vmatpush1.msra.mxu0 0.0
  %952 = vmatprep.subr.mxu0 0.0
  %953 = vmatpush1.msra.mxu0 0.0
  %954 = vmatprep.subr.mxu0 0.0
  %955 = vmatpush1.msra.mxu0 0.0
  %956 = vmatprep.subr.mxu0 0.0
  %957 = vmatpush1.msra.mxu0 0.0
  %958 = vmatprep.subr.mxu0 0.0
  %959 = vmatpush1.msra.mxu0 0.0
  %960 = vmatprep.subr.mxu0 0.0
  %961 = vmatpush1.msra.mxu0 0.0
  %962 = vmatprep.subr.mxu0 0.0
  %963 = vmatpush1.msra.mxu0 0.0
  %964 = vmatprep.subr.mxu0 0.0
  %965 = vmatpush1.msra.mxu0 0.0
  %966 = vmatprep.subr.mxu0 0.0
  %967 = vmatpush1.msra.mxu0 0.0
  %968 = vmatprep.subr.mxu0 0.0
  %969 = vmatpush1.msra.mxu0 0.0
  %970 = vmatprep.subr.mxu0 0.0
  %971 = vmatpush1.msra.mxu0 0.0
  %972 = vmatprep.subr.mxu0 0.0
  %973 = vmatpush1.msra.mxu0 0.0
  %974 = vmatprep.mubr.f32.mxu0 0.0
  %975 = vmatmul.mubr.f32.gmra.mrb[0].mxu0 %v899
  %v976 = vpop.f32.mrb[0].mxu0
  %v977 = vadd.f32 %v896, %v976
  %v978 = vpop.f32.mrb[0].mxu0
  %979 = vmatprep.mubr.f32.mxu0 0.0
  %980 = vmatmul.mubr.f32.gmra.mrb[0].mxu0 %v902
  %v981 = vpop.f32.mrb[0].mxu0
  %v982 = vadd.f32 %v896, %v981
  %v983 = vpop.f32.mrb[0].mxu0
  %984 = vmatprep.mubr.f32.mxu0 0.0
  %985 = vmatmul.mubr.f32.gmra.mrb[0].mxu0 %v905
  %v986 = vpop.f32.mrb[0].mxu0
  %v987 = vadd.f32 %v896, %v986
  %v988 = vpop.f32.mrb[0].mxu0
  %989 = vmatprep.mubr.f32.mxu0 0.0
  %990 = vmatmul.mubr.f32.gmra.mrb[0].mxu0 %v908
  %v991 = vpop.f32.mrb[0].mxu0
  %v992 = vadd.f32 %v896, %v991
  %v993 = vpop.f32.mrb[0].mxu0
  %994 = vdwg.mxu0
  %v995 = vadd.f32 %v150, %v977
  %v996 = vadd.f32 %v151, %v982
  %v997 = vadd.f32 %v152, %v987
  %v998 = vadd.f32 %v153, %v992
  %v999 = vrcp.pop 1.4142135
  %v1000 = vmul.f32 %v995, %v999
  %v1001 = vmul.f32 %v996, %v999
  %v1002 = vmul.f32 %v997, %v999
  %v1003 = vmul.f32 %v998, %v999
  %v1004 = vadd.f32 %v977, 0.0
  %v1005 = vadd.f32 %v982, 0.0
  %v1006 = vadd.f32 %v987, 0.0
  %v1007 = vadd.f32 %v992, 0.0
  %1012 = vrot.lane.b32.xlu0 %v570, 96
  %v1013 = vpop.permute.xlu0 %1012
  %1014 = vrot.lane.b32.xlu0 %v571, 96
  %v1015 = vpop.permute.xlu0 %1014
  %1016 = vrot.lane.b32.xlu0 %v572, 96
  %v1017 = vpop.permute.xlu0 %1016
  %1018 = vrot.lane.b32.xlu0 %v573, 96
  %v1019 = vpop.permute.xlu0 %1018
  %v1024 = vadd.f32 %v1000, %v1013
  %v1025 = vadd.f32 %v1001, %v1015
  %v1026 = vadd.f32 %v1002, %v1017
  %v1027 = vadd.f32 %v1003, %v1019
  %v1028 = vrot.slane %v1024, 7
  %v1029 = vrot.slane %v1025, 7
  %v1030 = vrot.slane %v1026, 7
  %v1031 = vrot.slane %v1027, 7
  %v1032 = vsel %vm659, %v1030, %v1031
  %v1033 = vsel %vm659, %v1029, %v1030
  %v1034 = vsel %vm659, %v1028, %v1029
  %v1035 = vsel %vm659, %v1031, %v1028
  %v1036 = vmul.f32 %v1035, %v635
  %v1037 = vmul.f32 %v1034, %v636
  %v1038 = vmul.f32 %v1033, %v637
  %v1039 = vmul.f32 %v1032, %v638
  %v1040 = vrot.slane %v1024, 1
  %v1041 = vrot.slane %v1025, 1
  %v1042 = vrot.slane %v1026, 1
  %v1043 = vrot.slane %v1027, 1
  %v1044 = vsel %vm672, %v1042, %v1043
  %v1045 = vsel %vm672, %v1041, %v1042
  %v1046 = vsel %vm672, %v1040, %v1041
  %v1047 = vsel %vm672, %v1043, %v1040
  %v1048 = vmul.f32 %v1046, %v647
  %v1049 = vmul.f32 %v1045, %v648
  %v1050 = vmul.f32 %v1044, %v649
  %v1051 = vmul.f32 %v1047, %v650
  %1056 = vrot.lane.b32.xlu0 %v1024, 32
  %v1057 = vpop.permute.xlu0 %1056
  %1058 = vrot.lane.b32.xlu0 %v1025, 32
  %v1059 = vpop.permute.xlu0 %1058
  %1060 = vrot.lane.b32.xlu0 %v1026, 32
  %v1061 = vpop.permute.xlu0 %1060
  %1062 = vrot.lane.b32.xlu0 %v1027, 32
  %v1063 = vpop.permute.xlu0 %1062
  %1072 = vrot.lane.b32.xlu0 %v1048, 64
  %v1073 = vpop.permute.xlu0 %1072
  %1074 = vrot.lane.b32.xlu0 %v1049, 64
  %v1075 = vpop.permute.xlu0 %1074
  %1076 = vrot.lane.b32.xlu0 %v1050, 64
  %v1077 = vpop.permute.xlu0 %1076
  %1078 = vrot.lane.b32.xlu0 %v1051, 64
  %v1079 = vpop.permute.xlu0 %1078
  %v1084 = vsel %vm169, %v1036, %v1057
  %v1085 = vsel %vm169, %v1037, %v1059
  %v1086 = vsel %vm169, %v1038, %v1061
  %v1087 = vsel %vm169, %v1039, %v1063
  %v1088 = vsel %vm717, %v1084, %v1073
  %v1089 = vsel %vm717, %v1085, %v1075
  %v1090 = vsel %vm717, %v1086, %v1077
  %v1091 = vsel %vm717, %v1087, %v1079
  %v1092 = vld [vmem:[%s4 + $0x8] sm:$0xff]
  %v1093 = vld [vmem:[%s4 + $0x28] sm:$0xff]
  %v1094 = vld [vmem:[%s4 + $0x48] sm:$0xff]
  %v1095 = vld [vmem:[%s4 + $0x68] sm:$0xff]
  %v1096 = vld [vmem:[%s4 + $0x88] sm:$0xff]
  %v1097 = vld [vmem:[%s4 + $0xa8] sm:$0xff]
  %v1098 = vld [vmem:[%s4 + $0xc8] sm:$0xff]
  %v1099 = vld [vmem:[%s4 + $0xe8] sm:$0xff]
  %v1100 = vld [vmem:[%s4 + $0x108] sm:$0xff]
  %v1101 = vld [vmem:[%s4 + $0x128] sm:$0xff]
  %v1102 = vld [vmem:[%s4 + $0x148] sm:$0xff]
  %v1103 = vld [vmem:[%s4 + $0x168] sm:$0xff]
  %v1104 = vld [vmem:[%s6 + $0x6] sm:$0x1]
  %v1106 = vlaneseq
  %v1107 = vshrl.u32 %v1106, 7
  %v1108 = vsub.s32 0, %v1107
  %v1109 = vrot.slane %v1104, %v1108
  %v1112 = vsel %vm741, %v1088, 0
  %v1115 = vsel %vm741, %v1089, 0
  %v1118 = vsel %vm741, %v1090, 0
  %v1121 = vsel %vm741, %v1091, 0
  %1123 = vmatprep.subr.mxu0 0.0
  %1124 = vmatpush1.msra.mxu0 %v1092
  %1125 = vmatprep.subr.mxu0 0.0
  %1126 = vmatpush1.msra.mxu0 %v1093
  %1127 = vmatprep.subr.mxu0 0.0
  %1128 = vmatpush1.msra.mxu0 %v1094
  %1129 = vmatprep.subr.mxu0 0.0
  %1130 = vmatpush1.msra.mxu0 %v1095
  %1131 = vmatprep.subr.mxu0 0.0
  %1132 = vmatpush1.msra.mxu0 %v1096
  %1133 = vmatprep.subr.mxu0 0.0
  %1134 = vmatpush1.msra.mxu0 %v1097
  %1135 = vmatprep.subr.mxu0 0.0
  %1136 = vmatpush1.msra.mxu0 %v1098
  %1137 = vmatprep.subr.mxu0 0.0
  %1138 = vmatpush1.msra.mxu0 %v1099
  %1139 = vmatprep.subr.mxu0 0.0
  %1140 = vmatpush1.msra.mxu0 %v1100
  %1141 = vmatprep.subr.mxu0 0.0
  %1142 = vmatpush1.msra.mxu0 %v1101
  %1143 = vmatprep.subr.mxu0 0.0
  %1144 = vmatpush1.msra.mxu0 %v1102
  %1145 = vmatprep.subr.mxu0 0.0
  %1146 = vmatpush1.msra.mxu0 %v1103
  %1147 = vmatprep.subr.mxu0 0.0
  %1148 = vmatpush1.msra.mxu0 0.0
  %1149 = vmatprep.subr.mxu0 0.0
  %1150 = vmatpush1.msra.mxu0 0.0
  %1151 = vmatprep.subr.mxu0 0.0
  %1152 = vmatpush1.msra.mxu0 0.0
  %1153 = vmatprep.subr.mxu0 0.0
  %1154 = vmatpush1.msra.mxu0 0.0
  %1155 = vmatprep.subr.mxu0 0.0
  %1156 = vmatpush1.msra.mxu0 0.0
  %1157 = vmatprep.subr.mxu0 0.0
  %1158 = vmatpush1.msra.mxu0 0.0
  %1159 = vmatprep.subr.mxu0 0.0
  %1160 = vmatpush1.msra.mxu0 0.0
  %1161 = vmatprep.subr.mxu0 0.0
  %1162 = vmatpush1.msra.mxu0 0.0
  %1163 = vmatprep.subr.mxu0 0.0
  %1164 = vmatpush1.msra.mxu0 0.0
  %1165 = vmatprep.subr.mxu0 0.0
  %1166 = vmatpush1.msra.mxu0 0.0
  %1167 = vmatprep.subr.mxu0 0.0
  %1168 = vmatpush1.msra.mxu0 0.0
  %1169 = vmatprep.subr.mxu0 0.0
  %1170 = vmatpush1.msra.mxu0 0.0
  %1171 = vmatprep.subr.mxu0 0.0
  %1172 = vmatpush1.msra.mxu0 0.0
  %1173 = vmatprep.subr.mxu0 0.0
  %1174 = vmatpush1.msra.mxu0 0.0
  %1175 = vmatprep.subr.mxu0 0.0
  %1176 = vmatpush1.msra.mxu0 0.0
  %1177 = vmatprep.subr.mxu0 0.0
  %1178 = vmatpush1.msra.mxu0 0.0
  %1179 = vmatprep.subr.mxu0 0.0
  %1180 = vmatpush1.msra.mxu0 0.0
  %1181 = vmatprep.subr.mxu0 0.0
  %1182 = vmatpush1.msra.mxu0 0.0
  %1183 = vmatprep.subr.mxu0 0.0
  %1184 = vmatpush1.msra.mxu0 0.0
  %1185 = vmatprep.subr.mxu0 0.0
  %1186 = vmatpush1.msra.mxu0 0.0
  %1187 = vmatprep.mubr.f32.mxu0 0.0
  %1188 = vmatmul.mubr.f32.gmra.mrb[0].mxu0 %v1112
  %v1189 = vpop.f32.mrb[0].mxu0
  %v1190 = vadd.f32 %v1109, %v1189
  %v1191 = vpop.f32.mrb[0].mxu0
  %1192 = vmatprep.mubr.f32.mxu0 0.0
  %1193 = vmatmul.mubr.f32.gmra.mrb[0].mxu0 %v1115
  %v1194 = vpop.f32.mrb[0].mxu0
  %v1195 = vadd.f32 %v1109, %v1194
  %v1196 = vpop.f32.mrb[0].mxu0
  %1197 = vmatprep.mubr.f32.mxu0 0.0
  %1198 = vmatmul.mubr.f32.gmra.mrb[0].mxu0 %v1118
  %v1199 = vpop.f32.mrb[0].mxu0
  %v1200 = vadd.f32 %v1109, %v1199
  %v1201 = vpop.f32.mrb[0].mxu0
  %1202 = vmatprep.mubr.f32.mxu0 0.0
  %1203 = vmatmul.mubr.f32.gmra.mrb[0].mxu0 %v1121
  %v1204 = vpop.f32.mrb[0].mxu0
  %v1205 = vadd.f32 %v1109, %v1204
  %v1206 = vpop.f32.mrb[0].mxu0
  %1207 = vdwg.mxu0
  %v1208 = vxor.u32 %v1190, 2147483648
  %v1209 = vxor.u32 %v1195, 2147483648
  %v1210 = vxor.u32 %v1200, 2147483648
  %v1211 = vxor.u32 %v1205, 2147483648
  %v1212 = vmul.f32 %v1208, 1.442695
  %v1213 = vpow.pop %v1212
  %v1214 = vmul.f32 %v1209, 1.442695
  %v1215 = vpow.pop %v1214
  %v1216 = vmul.f32 %v1210, 1.442695
  %v1217 = vpow.pop %v1216
  %v1218 = vmul.f32 %v1211, 1.442695
  %v1219 = vpow.pop %v1218
  %v1220 = vadd.f32 %v1213, 1.0
  %v1221 = vadd.f32 %v1215, 1.0
  %v1222 = vadd.f32 %v1217, 1.0
  %v1223 = vadd.f32 %v1219, 1.0
  %v1224 = vrcp.pop %v1220
  %v1225 = vmul.f32 1.0, %v1224
  %v1226 = vrcp.pop %v1221
  %v1227 = vmul.f32 1.0, %v1226
  %v1228 = vrcp.pop %v1222
  %v1229 = vmul.f32 1.0, %v1228
  %v1230 = vrcp.pop %v1223
  %v1231 = vmul.f32 1.0, %v1230
  %v1232 = vtanh.pop %v1190
  %v1233 = vtanh.pop %v1195
  %v1234 = vtanh.pop %v1200
  %v1235 = vtanh.pop %v1205
  %1240 = vrot.lane.b32.xlu0 %v1232, 96
  %v1241 = vpop.permute.xlu0 %1240
  %1242 = vrot.lane.b32.xlu0 %v1233, 96
  %v1243 = vpop.permute.xlu0 %1242
  %1244 = vrot.lane.b32.xlu0 %v1234, 96
  %v1245 = vpop.permute.xlu0 %1244
  %1246 = vrot.lane.b32.xlu0 %v1235, 96
  %v1247 = vpop.permute.xlu0 %1246
  %v1252 = vmul.f32 %v1225, %v1241
  %v1253 = vmul.f32 %v1227, %v1243
  %v1254 = vmul.f32 %v1229, %v1245
  %v1255 = vmul.f32 %v1231, %v1247
  %v1256 = vld [vmem:[%s5 + $0x8] sm:$0xff]
  %v1257 = vld [vmem:[%s5 + $0x38] sm:$0xff]
  %v1258 = vld [vmem:[%s5 + $0x68] sm:$0xff]
  %v1259 = vld [vmem:[%s5 + $0x98] sm:$0xff]
  %v1260 = vld [vmem:[%s6 + $0xa] sm:$0x1]
  %v1262 = vlaneseq
  %v1263 = vshrl.u32 %v1262, 7
  %v1264 = vsub.s32 0, %v1263
  %v1265 = vrot.slane %v1260, %v1264
  %v1268 = vsel %vm169, %v1252, 0
  %v1271 = vsel %vm169, %v1253, 0
  %v1274 = vsel %vm169, %v1254, 0
  %v1277 = vsel %vm169, %v1255, 0
  %1279 = vmatprep.subr.mxu0 0.0
  %1280 = vmatpush1.msra.mxu0 %v1256
  %1281 = vmatprep.subr.mxu0 0.0
  %1282 = vmatpush1.msra.mxu0 %v1257
  %1283 = vmatprep.subr.mxu0 0.0
  %1284 = vmatpush1.msra.mxu0 %v1258
  %1285 = vmatprep.subr.mxu0 0.0
  %1286 = vmatpush1.msra.mxu0 %v1259
  %1287 = vmatprep.subr.mxu0 0.0
  %1288 = vmatpush1.msra.mxu0 0.0
  %1289 = vmatprep.subr.mxu0 0.0
  %1290 = vmatpush1.msra.mxu0 0.0
  %1291 = vmatprep.subr.mxu0 0.0
  %1292 = vmatpush1.msra.mxu0 0.0
  %1293 = vmatprep.subr.mxu0 0.0
  %1294 = vmatpush1.msra.mxu0 0.0
  %1295 = vmatprep.subr.mxu0 0.0
  %1296 = vmatpush1.msra.mxu0 0.0
  %1297 = vmatprep.subr.mxu0 0.0
  %1298 = vmatpush1.msra.mxu0 0.0
  %1299 = vmatprep.subr.mxu0 0.0
  %1300 = vmatpush1.msra.mxu0 0.0
  %1301 = vmatprep.subr.mxu0 0.0
  %1302 = vmatpush1.msra.mxu0 0.0
  %1303 = vmatprep.subr.mxu0 0.0
  %1304 = vmatpush1.msra.mxu0 0.0
  %1305 = vmatprep.subr.mxu0 0.0
  %1306 = vmatpush1.msra.mxu0 0.0
  %1307 = vmatprep.subr.mxu0 0.0
  %1308 = vmatpush1.msra.mxu0 0.0
  %1309 = vmatprep.subr.mxu0 0.0
  %1310 = vmatpush1.msra.mxu0 0.0
  %1311 = vmatprep.subr.mxu0 0.0
  %1312 = vmatpush1.msra.mxu0 0.0
  %1313 = vmatprep.subr.mxu0 0.0
  %1314 = vmatpush1.msra.mxu0 0.0
  %1315 = vmatprep.subr.mxu0 0.0
  %1316 = vmatpush1.msra.mxu0 0.0
  %1317 = vmatprep.subr.mxu0 0.0
  %1318 = vmatpush1.msra.mxu0 0.0
  %1319 = vmatprep.subr.mxu0 0.0
  %1320 = vmatpush1.msra.mxu0 0.0
  %1321 = vmatprep.subr.mxu0 0.0
  %1322 = vmatpush1.msra.mxu0 0.0
  %1323 = vmatprep.subr.mxu0 0.0
  %1324 = vmatpush1.msra.mxu0 0.0
  %1325 = vmatprep.subr.mxu0 0.0
  %1326 = vmatpush1.msra.mxu0 0.0
  %1327 = vmatprep.subr.mxu0 0.0
  %1328 = vmatpush1.msra.mxu0 0.0
  %1329 = vmatprep.subr.mxu0 0.0
  %1330 = vmatpush1.msra.mxu0 0.0
  %1331 = vmatprep.subr.mxu0 0.0
  %1332 = vmatpush1.msra.mxu0 0.0
  %1333 = vmatprep.subr.mxu0 0.0
  %1334 = vmatpush1.msra.mxu0 0.0
  %1335 = vmatprep.subr.mxu0 0.0
  %1336 = vmatpush1.msra.mxu0 0.0
  %1337 = vmatprep.subr.mxu0 0.0
  %1338 = vmatpush1.msra.mxu0 0.0
  %1339 = vmatprep.subr.mxu0 0.0
  %1340 = vmatpush1.msra.mxu0 0.0
  %1341 = vmatprep.subr.mxu0 0.0
  %1342 = vmatpush1.msra.mxu0 0.0
  %1343 = vmatprep.mubr.f32.mxu0 0.0
  %1344 = vmatmul.mubr.f32.gmra.mrb[0].mxu0 %v1268
  %v1345 = vpop.f32.mrb[0].mxu0
  %v1346 = vadd.f32 %v1265, %v1345
  %v1347 = vpop.f32.mrb[0].mxu0
  %1348 = vmatprep.mubr.f32.mxu0 0.0
  %1349 = vmatmul.mubr.f32.gmra.mrb[0].mxu0 %v1271
  %v1350 = vpop.f32.mrb[0].mxu0
  %v1351 = vadd.f32 %v1265, %v1350
  %v1352 = vpop.f32.mrb[0].mxu0
  %1353 = vmatprep.mubr.f32.mxu0 0.0
  %1354 = vmatmul.mubr.f32.gmra.mrb[0].mxu0 %v1274
  %v1355 = vpop.f32.mrb[0].mxu0
  %v1356 = vadd.f32 %v1265, %v1355
  %v1357 = vpop.f32.mrb[0].mxu0
  %1358 = vmatprep.mubr.f32.mxu0 0.0
  %1359 = vmatmul.mubr.f32.gmra.mrb[0].mxu0 %v1277
  %v1360 = vpop.f32.mrb[0].mxu0
  %v1361 = vadd.f32 %v1265, %v1360
  %v1362 = vpop.f32.mrb[0].mxu0
  %1363 = vdwg.mxu0
  %v1364 = vadd.f32 %v1000, %v1346
  %v1365 = vadd.f32 %v1001, %v1351
  %v1366 = vadd.f32 %v1002, %v1356
  %v1367 = vadd.f32 %v1003, %v1361
  %v1368 = vmul.f32 %v1364, %v999
  %v1369 = vmul.f32 %v1365, %v999
  %v1370 = vmul.f32 %v1366, %v999
  %v1371 = vmul.f32 %v1367, %v999
  %v1372 = vadd.f32 %v1004, %v1346
  %v1373 = vadd.f32 %v1005, %v1351
  %v1374 = vadd.f32 %v1006, %v1356
  %v1375 = vadd.f32 %v1007, %v1361
  %1376 = vrot.lane.b32.xlu0 %v570, 64
  %v1377 = vpop.permute.xlu0 %1376
  %1378 = vrot.lane.b32.xlu0 %v571, 64
  %v1379 = vpop.permute.xlu0 %1378
  %1380 = vrot.lane.b32.xlu0 %v572, 64
  %v1381 = vpop.permute.xlu0 %1380
  %1382 = vrot.lane.b32.xlu0 %v573, 64
  %v1383 = vpop.permute.xlu0 %1382
  %v1388 = vadd.f32 %v1368, %v1377
  %v1389 = vadd.f32 %v1369, %v1379
  %v1390 = vadd.f32 %v1370, %v1381
  %v1391 = vadd.f32 %v1371, %v1383
  %v1392 = vrot.slane %v1388, 7
  %v1393 = vrot.slane %v1389, 7
  %v1394 = vrot.slane %v1390, 7
  %v1395 = vrot.slane %v1391, 7
  %v1396 = vsel %vm659, %v1394, %v1395
  %v1397 = vsel %vm659, %v1393, %v1394
  %v1398 = vsel %vm659, %v1392, %v1393
  %v1399 = vsel %vm659, %v1395, %v1392
  %v1400 = vmul.f32 %v1399, %v635
  %v1401 = vmul.f32 %v1398, %v636
  %v1402 = vmul.f32 %v1397, %v637
  %v1403 = vmul.f32 %v1396, %v638
  %v1404 = vrot.slane %v1388, 1
  %v1405 = vrot.slane %v1389, 1
  %v1406 = vrot.slane %v1390, 1
  %v1407 = vrot.slane %v1391, 1
  %v1408 = vsel %vm672, %v1406, %v1407
  %v1409 = vsel %vm672, %v1405, %v1406
  %v1410 = vsel %vm672, %v1404, %v1405
  %v1411 = vsel %vm672, %v1407, %v1404
  %v1412 = vmul.f32 %v1410, %v647
  %v1413 = vmul.f32 %v1409, %v648
  %v1414 = vmul.f32 %v1408, %v649
  %v1415 = vmul.f32 %v1411, %v650
  %1420 = vrot.lane.b32.xlu0 %v1388, 32
  %v1421 = vpop.permute.xlu0 %1420
  %1422 = vrot.lane.b32.xlu0 %v1389, 32
  %v1423 = vpop.permute.xlu0 %1422
  %1424 = vrot.lane.b32.xlu0 %v1390, 32
  %v1425 = vpop.permute.xlu0 %1424
  %1426 = vrot.lane.b32.xlu0 %v1391, 32
  %v1427 = vpop.permute.xlu0 %1426
  %1436 = vrot.lane.b32.xlu0 %v1412, 64
  %v1437 = vpop.permute.xlu0 %1436
  %1438 = vrot.lane.b32.xlu0 %v1413, 64
  %v1439 = vpop.permute.xlu0 %1438
  %1440 = vrot.lane.b32.xlu0 %v1414, 64
  %v1441 = vpop.permute.xlu0 %1440
  %1442 = vrot.lane.b32.xlu0 %v1415, 64
  %v1443 = vpop.permute.xlu0 %1442
  %v1448 = vsel %vm169, %v1400, %v1421
  %v1449 = vsel %vm169, %v1401, %v1423
  %v1450 = vsel %vm169, %v1402, %v1425
  %v1451 = vsel %vm169, %v1403, %v1427
  %v1452 = vsel %vm717, %v1448, %v1437
  %v1453 = vsel %vm717, %v1449, %v1439
  %v1454 = vsel %vm717, %v1450, %v1441
  %v1455 = vsel %vm717, %v1451, %v1443
  %v1456 = vld [vmem:[%s4 + $0x10] sm:$0xff]
  %v1457 = vld [vmem:[%s4 + $0x30] sm:$0xff]
  %v1458 = vld [vmem:[%s4 + $0x50] sm:$0xff]
  %v1459 = vld [vmem:[%s4 + $0x70] sm:$0xff]
  %v1460 = vld [vmem:[%s4 + $0x90] sm:$0xff]
  %v1461 = vld [vmem:[%s4 + $0xb0] sm:$0xff]
  %v1462 = vld [vmem:[%s4 + $0xd0] sm:$0xff]
  %v1463 = vld [vmem:[%s4 + $0xf0] sm:$0xff]
  %v1464 = vld [vmem:[%s4 + $0x110] sm:$0xff]
  %v1465 = vld [vmem:[%s4 + $0x130] sm:$0xff]
  %v1466 = vld [vmem:[%s4 + $0x150] sm:$0xff]
  %v1467 = vld [vmem:[%s4 + $0x170] sm:$0xff]
  %v1468 = vld [vmem:[%s6 + $0x7] sm:$0x1]
  %v1470 = vlaneseq
  %v1471 = vshrl.u32 %v1470, 7
  %v1472 = vsub.s32 0, %v1471
  %v1473 = vrot.slane %v1468, %v1472
  %v1476 = vsel %vm741, %v1452, 0
  %v1479 = vsel %vm741, %v1453, 0
  %v1482 = vsel %vm741, %v1454, 0
  %v1485 = vsel %vm741, %v1455, 0
  %1487 = vmatprep.subr.mxu0 0.0
  %1488 = vmatpush1.msra.mxu0 %v1456
  %1489 = vmatprep.subr.mxu0 0.0
  %1490 = vmatpush1.msra.mxu0 %v1457
  %1491 = vmatprep.subr.mxu0 0.0
  %1492 = vmatpush1.msra.mxu0 %v1458
  %1493 = vmatprep.subr.mxu0 0.0
  %1494 = vmatpush1.msra.mxu0 %v1459
  %1495 = vmatprep.subr.mxu0 0.0
  %1496 = vmatpush1.msra.mxu0 %v1460
  %1497 = vmatprep.subr.mxu0 0.0
  %1498 = vmatpush1.msra.mxu0 %v1461
  %1499 = vmatprep.subr.mxu0 0.0
  %1500 = vmatpush1.msra.mxu0 %v1462
  %1501 = vmatprep.subr.mxu0 0.0
  %1502 = vmatpush1.msra.mxu0 %v1463
  %1503 = vmatprep.subr.mxu0 0.0
  %1504 = vmatpush1.msra.mxu0 %v1464
  %1505 = vmatprep.subr.mxu0 0.0
  %1506 = vmatpush1.msra.mxu0 %v1465
  %1507 = vmatprep.subr.mxu0 0.0
  %1508 = vmatpush1.msra.mxu0 %v1466
  %1509 = vmatprep.subr.mxu0 0.0
  %1510 = vmatpush1.msra.mxu0 %v1467
  %1511 = vmatprep.subr.mxu0 0.0
  %1512 = vmatpush1.msra.mxu0 0.0
  %1513 = vmatprep.subr.mxu0 0.0
  %1514 = vmatpush1.msra.mxu0 0.0
  %1515 = vmatprep.subr.mxu0 0.0
  %1516 = vmatpush1.msra.mxu0 0.0
  %1517 = vmatprep.subr.mxu0 0.0
  %1518 = vmatpush1.msra.mxu0 0.0
  %1519 = vmatprep.subr.mxu0 0.0
  %1520 = vmatpush1.msra.mxu0 0.0
  %1521 = vmatprep.subr.mxu0 0.0
  %1522 = vmatpush1.msra.mxu0 0.0
  %1523 = vmatprep.subr.mxu0 0.0
  %1524 = vmatpush1.msra.mxu0 0.0
  %1525 = vmatprep.subr.mxu0 0.0
  %1526 = vmatpush1.msra.mxu0 0.0
  %1527 = vmatprep.subr.mxu0 0.0
  %1528 = vmatpush1.msra.mxu0 0.0
  %1529 = vmatprep.subr.mxu0 0.0
  %1530 = vmatpush1.msra.mxu0 0.0
  %1531 = vmatprep.subr.mxu0 0.0
  %1532 = vmatpush1.msra.mxu0 0.0
  %1533 = vmatprep.subr.mxu0 0.0
  %1534 = vmatpush1.msra.mxu0 0.0
  %1535 = vmatprep.subr.mxu0 0.0
  %1536 = vmatpush1.msra.mxu0 0.0
  %1537 = vmatprep.subr.mxu0 0.0
  %1538 = vmatpush1.msra.mxu0 0.0
  %1539 = vmatprep.subr.mxu0 0.0
  %1540 = vmatpush1.msra.mxu0 0.0
  %1541 = vmatprep.subr.mxu0 0.0
  %1542 = vmatpush1.msra.mxu0 0.0
  %1543 = vmatprep.subr.mxu0 0.0
  %1544 = vmatpush1.msra.mxu0 0.0
  %1545 = vmatprep.subr.mxu0 0.0
  %1546 = vmatpush1.msra.mxu0 0.0
  %1547 = vmatprep.subr.mxu0 0.0
  %1548 = vmatpush1.msra.mxu0 0.0
  %1549 = vmatprep.subr.mxu0 0.0
  %1550 = vmatpush1.msra.mxu0 0.0
  %1551 = vmatprep.mubr.f32.mxu0 0.0
  %1552 = vmatmul.mubr.f32.gmra.mrb[0].mxu0 %v1476
  %v1553 = vpop.f32.mrb[0].mxu0
  %v1554 = vadd.f32 %v1473, %v1553
  %v1555 = vpop.f32.mrb[0].mxu0
  %1556 = vmatprep.mubr.f32.mxu0 0.0
  %1557 = vmatmul.mubr.f32.gmra.mrb[0].mxu0 %v1479
  %v1558 = vpop.f32.mrb[0].mxu0
  %v1559 = vadd.f32 %v1473, %v1558
  %v1560 = vpop.f32.mrb[0].mxu0
  %1561 = vmatprep.mubr.f32.mxu0 0.0
  %1562 = vmatmul.mubr.f32.gmra.mrb[0].mxu0 %v1482
  %v1563 = vpop.f32.mrb[0].mxu0
  %v1564 = vadd.f32 %v1473, %v1563
  %v1565 = vpop.f32.mrb[0].mxu0
  %1566 = vmatprep.mubr.f32.mxu0 0.0
  %1567 = vmatmul.mubr.f32.gmra.mrb[0].mxu0 %v1485
  %v1568 = vpop.f32.mrb[0].mxu0
  %v1569 = vadd.f32 %v1473, %v1568
  %v1570 = vpop.f32.mrb[0].mxu0
  %1571 = vdwg.mxu0
  %v1572 = vxor.u32 %v1554, 2147483648
  %v1573 = vxor.u32 %v1559, 2147483648
  %v1574 = vxor.u32 %v1564, 2147483648
  %v1575 = vxor.u32 %v1569, 2147483648
  %v1576 = vmul.f32 %v1572, 1.442695
  %v1577 = vpow.pop %v1576
  %v1578 = vmul.f32 %v1573, 1.442695
  %v1579 = vpow.pop %v1578
  %v1580 = vmul.f32 %v1574, 1.442695
  %v1581 = vpow.pop %v1580
  %v1582 = vmul.f32 %v1575, 1.442695
  %v1583 = vpow.pop %v1582
  %v1584 = vadd.f32 %v1577, 1.0
  %v1585 = vadd.f32 %v1579, 1.0
  %v1586 = vadd.f32 %v1581, 1.0
  %v1587 = vadd.f32 %v1583, 1.0
  %v1588 = vrcp.pop %v1584
  %v1589 = vmul.f32 1.0, %v1588
  %v1590 = vrcp.pop %v1585
  %v1591 = vmul.f32 1.0, %v1590
  %v1592 = vrcp.pop %v1586
  %v1593 = vmul.f32 1.0, %v1592
  %v1594 = vrcp.pop %v1587
  %v1595 = vmul.f32 1.0, %v1594
  %v1596 = vtanh.pop %v1554
  %v1597 = vtanh.pop %v1559
  %v1598 = vtanh.pop %v1564
  %v1599 = vtanh.pop %v1569
  %1604 = vrot.lane.b32.xlu0 %v1596, 96
  %v1605 = vpop.permute.xlu0 %1604
  %1606 = vrot.lane.b32.xlu0 %v1597, 96
  %v1607 = vpop.permute.xlu0 %1606
  %1608 = vrot.lane.b32.xlu0 %v1598, 96
  %v1609 = vpop.permute.xlu0 %1608
  %1610 = vrot.lane.b32.xlu0 %v1599, 96
  %v1611 = vpop.permute.xlu0 %1610
  %v1616 = vmul.f32 %v1589, %v1605
  %v1617 = vmul.f32 %v1591, %v1607
  %v1618 = vmul.f32 %v1593, %v1609
  %v1619 = vmul.f32 %v1595, %v1611
  %v1620 = vld [vmem:[%s5 + $0x10] sm:$0xff]
  %v1621 = vld [vmem:[%s5 + $0x40] sm:$0xff]
  %v1622 = vld [vmem:[%s5 + $0x70] sm:$0xff]
  %v1623 = vld [vmem:[%s5 + $0xa0] sm:$0xff]
  %v1624 = vld [vmem:[%s6 + $0xb] sm:$0x1]
  %v1626 = vlaneseq
  %v1627 = vshrl.u32 %v1626, 7
  %v1628 = vsub.s32 0, %v1627
  %v1629 = vrot.slane %v1624, %v1628
  %v1632 = vsel %vm169, %v1616, 0
  %v1635 = vsel %vm169, %v1617, 0
  %v1638 = vsel %vm169, %v1618, 0
  %v1641 = vsel %vm169, %v1619, 0
  %1643 = vmatprep.subr.mxu0 0.0
  %1644 = vmatpush1.msra.mxu0 %v1620
  %1645 = vmatprep.subr.mxu0 0.0
  %1646 = vmatpush1.msra.mxu0 %v1621
  %1647 = vmatprep.subr.mxu0 0.0
  %1648 = vmatpush1.msra.mxu0 %v1622
  %1649 = vmatprep.subr.mxu0 0.0
  %1650 = vmatpush1.msra.mxu0 %v1623
  %1651 = vmatprep.subr.mxu0 0.0
  %1652 = vmatpush1.msra.mxu0 0.0
  %1653 = vmatprep.subr.mxu0 0.0
  %1654 = vmatpush1.msra.mxu0 0.0
  %1655 = vmatprep.subr.mxu0 0.0
  %1656 = vmatpush1.msra.mxu0 0.0
  %1657 = vmatprep.subr.mxu0 0.0
  %1658 = vmatpush1.msra.mxu0 0.0
  %1659 = vmatprep.subr.mxu0 0.0
  %1660 = vmatpush1.msra.mxu0 0.0
  %1661 = vmatprep.subr.mxu0 0.0
  %1662 = vmatpush1.msra.mxu0 0.0
  %1663 = vmatprep.subr.mxu0 0.0
  %1664 = vmatpush1.msra.mxu0 0.0
  %1665 = vmatprep.subr.mxu0 0.0
  %1666 = vmatpush1.msra.mxu0 0.0
  %1667 = vmatprep.subr.mxu0 0.0
  %1668 = vmatpush1.msra.mxu0 0.0
  %1669 = vmatprep.subr.mxu0 0.0
  %1670 = vmatpush1.msra.mxu0 0.0
  %1671 = vmatprep.subr.mxu0 0.0
  %1672 = vmatpush1.msra.mxu0 0.0
  %1673 = vmatprep.subr.mxu0 0.0
  %1674 = vmatpush1.msra.mxu0 0.0
  %1675 = vmatprep.subr.mxu0 0.0
  %1676 = vmatpush1.msra.mxu0 0.0
  %1677 = vmatprep.subr.mxu0 0.0
  %1678 = vmatpush1.msra.mxu0 0.0
  %1679 = vmatprep.subr.mxu0 0.0
  %1680 = vmatpush1.msra.mxu0 0.0
  %1681 = vmatprep.subr.mxu0 0.0
  %1682 = vmatpush1.msra.mxu0 0.0
  %1683 = vmatprep.subr.mxu0 0.0
  %1684 = vmatpush1.msra.mxu0 0.0
  %1685 = vmatprep.subr.mxu0 0.0
  %1686 = vmatpush1.msra.mxu0 0.0
  %1687 = vmatprep.subr.mxu0 0.0
  %1688 = vmatpush1.msra.mxu0 0.0
  %1689 = vmatprep.subr.mxu0 0.0
  %1690 = vmatpush1.msra.mxu0 0.0
  %1691 = vmatprep.subr.mxu0 0.0
  %1692 = vmatpush1.msra.mxu0 0.0
  %1693 = vmatprep.subr.mxu0 0.0
  %1694 = vmatpush1.msra.mxu0 0.0
  %1695 = vmatprep.subr.mxu0 0.0
  %1696 = vmatpush1.msra.mxu0 0.0
  %1697 = vmatprep.subr.mxu0 0.0
  %1698 = vmatpush1.msra.mxu0 0.0
  %1699 = vmatprep.subr.mxu0 0.0
  %1700 = vmatpush1.msra.mxu0 0.0
  %1701 = vmatprep.subr.mxu0 0.0
  %1702 = vmatpush1.msra.mxu0 0.0
  %1703 = vmatprep.subr.mxu0 0.0
  %1704 = vmatpush1.msra.mxu0 0.0
  %1705 = vmatprep.subr.mxu0 0.0
  %1706 = vmatpush1.msra.mxu0 0.0
  %1707 = vmatprep.mubr.f32.mxu0 0.0
  %1708 = vmatmul.mubr.f32.gmra.mrb[0].mxu0 %v1632
  %v1709 = vpop.f32.mrb[0].mxu0
  %v1710 = vadd.f32 %v1629, %v1709
  %v1711 = vpop.f32.mrb[0].mxu0
  %1712 = vmatprep.mubr.f32.mxu0 0.0
  %1713 = vmatmul.mubr.f32.gmra.mrb[0].mxu0 %v1635
  %v1714 = vpop.f32.mrb[0].mxu0
  %v1715 = vadd.f32 %v1629, %v1714
  %v1716 = vpop.f32.mrb[0].mxu0
  %1717 = vmatprep.mubr.f32.mxu0 0.0
  %1718 = vmatmul.mubr.f32.gmra.mrb[0].mxu0 %v1638
  %v1719 = vpop.f32.mrb[0].mxu0
  %v1720 = vadd.f32 %v1629, %v1719
  %v1721 = vpop.f32.mrb[0].mxu0
  %1722 = vmatprep.mubr.f32.mxu0 0.0
  %1723 = vmatmul.mubr.f32.gmra.mrb[0].mxu0 %v1641
  %v1724 = vpop.f32.mrb[0].mxu0
  %v1725 = vadd.f32 %v1629, %v1724
  %v1726 = vpop.f32.mrb[0].mxu0
  %1727 = vdwg.mxu0
  %v1728 = vadd.f32 %v1368, %v1710
  %v1729 = vadd.f32 %v1369, %v1715
  %v1730 = vadd.f32 %v1370, %v1720
  %v1731 = vadd.f32 %v1371, %v1725
  %v1732 = vmul.f32 %v1728, %v999
  %v1733 = vmul.f32 %v1729, %v999
  %v1734 = vmul.f32 %v1730, %v999
  %v1735 = vmul.f32 %v1731, %v999
  %v1736 = vadd.f32 %v1372, %v1710
  %v1737 = vadd.f32 %v1373, %v1715
  %v1738 = vadd.f32 %v1374, %v1720
  %v1739 = vadd.f32 %v1375, %v1725
  %1740 = vrot.lane.b32.xlu0 %v570, 32
  %v1741 = vpop.permute.xlu0 %1740
  %1742 = vrot.lane.b32.xlu0 %v571, 32
  %v1743 = vpop.permute.xlu0 %1742
  %1744 = vrot.lane.b32.xlu0 %v572, 32
  %v1745 = vpop.permute.xlu0 %1744
  %1746 = vrot.lane.b32.xlu0 %v573, 32
  %v1747 = vpop.permute.xlu0 %1746
  %v1752 = vadd.f32 %v1732, %v1741
  %v1753 = vadd.f32 %v1733, %v1743
  %v1754 = vadd.f32 %v1734, %v1745
  %v1755 = vadd.f32 %v1735, %v1747
  %v1756 = vrot.slane %v1752, 7
  %v1757 = vrot.slane %v1753, 7
  %v1758 = vrot.slane %v1754, 7
  %v1759 = vrot.slane %v1755, 7
  %v1760 = vsel %vm659, %v1758, %v1759
  %v1761 = vsel %vm659, %v1757, %v1758
  %v1762 = vsel %vm659, %v1756, %v1757
  %v1763 = vsel %vm659, %v1759, %v1756
  %v1764 = vmul.f32 %v1763, %v635
  %v1765 = vmul.f32 %v1762, %v636
  %v1766 = vmul.f32 %v1761, %v637
  %v1767 = vmul.f32 %v1760, %v638
  %v1768 = vrot.slane %v1752, 1
  %v1769 = vrot.slane %v1753, 1
  %v1770 = vrot.slane %v1754, 1
  %v1771 = vrot.slane %v1755, 1
  %v1772 = vsel %vm672, %v1770, %v1771
  %v1773 = vsel %vm672, %v1769, %v1770
  %v1774 = vsel %vm672, %v1768, %v1769
  %v1775 = vsel %vm672, %v1771, %v1768
  %v1776 = vmul.f32 %v1774, %v647
  %v1777 = vmul.f32 %v1773, %v648
  %v1778 = vmul.f32 %v1772, %v649
  %v1779 = vmul.f32 %v1775, %v650
  %1784 = vrot.lane.b32.xlu0 %v1752, 32
  %v1785 = vpop.permute.xlu0 %1784
  %1786 = vrot.lane.b32.xlu0 %v1753, 32
  %v1787 = vpop.permute.xlu0 %1786
  %1788 = vrot.lane.b32.xlu0 %v1754, 32
  %v1789 = vpop.permute.xlu0 %1788
  %1790 = vrot.lane.b32.xlu0 %v1755, 32
  %v1791 = vpop.permute.xlu0 %1790
  %1800 = vrot.lane.b32.xlu0 %v1776, 64
  %v1801 = vpop.permute.xlu0 %1800
  %1802 = vrot.lane.b32.xlu0 %v1777, 64
  %v1803 = vpop.permute.xlu0 %1802
  %1804 = vrot.lane.b32.xlu0 %v1778, 64
  %v1805 = vpop.permute.xlu0 %1804
  %1806 = vrot.lane.b32.xlu0 %v1779, 64
  %v1807 = vpop.permute.xlu0 %1806
  %v1812 = vsel %vm169, %v1764, %v1785
  %v1813 = vsel %vm169, %v1765, %v1787
  %v1814 = vsel %vm169, %v1766, %v1789
  %v1815 = vsel %vm169, %v1767, %v1791
  %v1816 = vsel %vm717, %v1812, %v1801
  %v1817 = vsel %vm717, %v1813, %v1803
  %v1818 = vsel %vm717, %v1814, %v1805
  %v1819 = vsel %vm717, %v1815, %v1807
  %v1820 = vld [vmem:[%s4 + $0x18] sm:$0xff]
  %v1821 = vld [vmem:[%s4 + $0x38] sm:$0xff]
  %v1822 = vld [vmem:[%s4 + $0x58] sm:$0xff]
  %v1823 = vld [vmem:[%s4 + $0x78] sm:$0xff]
  %v1824 = vld [vmem:[%s4 + $0x98] sm:$0xff]
  %v1825 = vld [vmem:[%s4 + $0xb8] sm:$0xff]
  %v1826 = vld [vmem:[%s4 + $0xd8] sm:$0xff]
  %v1827 = vld [vmem:[%s4 + $0xf8] sm:$0xff]
  %v1828 = vld [vmem:[%s4 + $0x118] sm:$0xff]
  %v1829 = vld [vmem:[%s4 + $0x138] sm:$0xff]
  %v1830 = vld [vmem:[%s4 + $0x158] sm:$0xff]
  %v1831 = vld [vmem:[%s4 + $0x178] sm:$0xff]
  %v1832 = vld [vmem:[%s6 + $0x8] sm:$0x1]
  %v1834 = vlaneseq
  %v1835 = vshrl.u32 %v1834, 7
  %v1836 = vsub.s32 0, %v1835
  %v1837 = vrot.slane %v1832, %v1836
  %v1840 = vsel %vm741, %v1816, 0
  %v1843 = vsel %vm741, %v1817, 0
  %v1846 = vsel %vm741, %v1818, 0
  %v1849 = vsel %vm741, %v1819, 0
  %1851 = vmatprep.subr.mxu0 0.0
  %1852 = vmatpush1.msra.mxu0 %v1820
  %1853 = vmatprep.subr.mxu0 0.0
  %1854 = vmatpush1.msra.mxu0 %v1821
  %1855 = vmatprep.subr.mxu0 0.0
  %1856 = vmatpush1.msra.mxu0 %v1822
  %1857 = vmatprep.subr.mxu0 0.0
  %1858 = vmatpush1.msra.mxu0 %v1823
  %1859 = vmatprep.subr.mxu0 0.0
  %1860 = vmatpush1.msra.mxu0 %v1824
  %1861 = vmatprep.subr.mxu0 0.0
  %1862 = vmatpush1.msra.mxu0 %v1825
  %1863 = vmatprep.subr.mxu0 0.0
  %1864 = vmatpush1.msra.mxu0 %v1826
  %1865 = vmatprep.subr.mxu0 0.0
  %1866 = vmatpush1.msra.mxu0 %v1827
  %1867 = vmatprep.subr.mxu0 0.0
  %1868 = vmatpush1.msra.mxu0 %v1828
  %1869 = vmatprep.subr.mxu0 0.0
  %1870 = vmatpush1.msra.mxu0 %v1829
  %1871 = vmatprep.subr.mxu0 0.0
  %1872 = vmatpush1.msra.mxu0 %v1830
  %1873 = vmatprep.subr.mxu0 0.0
  %1874 = vmatpush1.msra.mxu0 %v1831
  %1875 = vmatprep.subr.mxu0 0.0
  %1876 = vmatpush1.msra.mxu0 0.0
  %1877 = vmatprep.subr.mxu0 0.0
  %1878 = vmatpush1.msra.mxu0 0.0
  %1879 = vmatprep.subr.mxu0 0.0
  %1880 = vmatpush1.msra.mxu0 0.0
  %1881 = vmatprep.subr.mxu0 0.0
  %1882 = vmatpush1.msra.mxu0 0.0
  %1883 = vmatprep.subr.mxu0 0.0
  %1884 = vmatpush1.msra.mxu0 0.0
  %1885 = vmatprep.subr.mxu0 0.0
  %1886 = vmatpush1.msra.mxu0 0.0
  %1887 = vmatprep.subr.mxu0 0.0
  %1888 = vmatpush1.msra.mxu0 0.0
  %1889 = vmatprep.subr.mxu0 0.0
  %1890 = vmatpush1.msra.mxu0 0.0
  %1891 = vmatprep.subr.mxu0 0.0
  %1892 = vmatpush1.msra.mxu0 0.0
  %1893 = vmatprep.subr.mxu0 0.0
  %1894 = vmatpush1.msra.mxu0 0.0
  %1895 = vmatprep.subr.mxu0 0.0
  %1896 = vmatpush1.msra.mxu0 0.0
  %1897 = vmatprep.subr.mxu0 0.0
  %1898 = vmatpush1.msra.mxu0 0.0
  %1899 = vmatprep.subr.mxu0 0.0
  %1900 = vmatpush1.msra.mxu0 0.0
  %1901 = vmatprep.subr.mxu0 0.0
  %1902 = vmatpush1.msra.mxu0 0.0
  %1903 = vmatprep.subr.mxu0 0.0
  %1904 = vmatpush1.msra.mxu0 0.0
  %1905 = vmatprep.subr.mxu0 0.0
  %1906 = vmatpush1.msra.mxu0 0.0
  %1907 = vmatprep.subr.mxu0 0.0
  %1908 = vmatpush1.msra.mxu0 0.0
  %1909 = vmatprep.subr.mxu0 0.0
  %1910 = vmatpush1.msra.mxu0 0.0
  %1911 = vmatprep.subr.mxu0 0.0
  %1912 = vmatpush1.msra.mxu0 0.0
  %1913 = vmatprep.subr.mxu0 0.0
  %1914 = vmatpush1.msra.mxu0 0.0
  %1915 = vmatprep.mubr.f32.mxu0 0.0
  %1916 = vmatmul.mubr.f32.gmra.mrb[0].mxu0 %v1840
  %v1917 = vpop.f32.mrb[0].mxu0
  %v1918 = vadd.f32 %v1837, %v1917
  %v1919 = vpop.f32.mrb[0].mxu0
  %1920 = vmatprep.mubr.f32.mxu0 0.0
  %1921 = vmatmul.mubr.f32.gmra.mrb[0].mxu0 %v1843
  %v1922 = vpop.f32.mrb[0].mxu0
  %v1923 = vadd.f32 %v1837, %v1922
  %v1924 = vpop.f32.mrb[0].mxu0
  %1925 = vmatprep.mubr.f32.mxu0 0.0
  %1926 = vmatmul.mubr.f32.gmra.mrb[0].mxu0 %v1846
  %v1927 = vpop.f32.mrb[0].mxu0
  %v1928 = vadd.f32 %v1837, %v1927
  %v1929 = vpop.f32.mrb[0].mxu0
  %1930 = vmatprep.mubr.f32.mxu0 0.0
  %1931 = vmatmul.mubr.f32.gmra.mrb[0].mxu0 %v1849
  %v1932 = vpop.f32.mrb[0].mxu0
  %v1933 = vadd.f32 %v1837, %v1932
  %v1934 = vpop.f32.mrb[0].mxu0
  %1935 = vdwg.mxu0
  %v1936 = vxor.u32 %v1918, 2147483648
  %v1937 = vxor.u32 %v1923, 2147483648
  %v1938 = vxor.u32 %v1928, 2147483648
  %v1939 = vxor.u32 %v1933, 2147483648
  %v1940 = vmul.f32 %v1936, 1.442695
  %v1941 = vpow.pop %v1940
  %v1942 = vmul.f32 %v1937, 1.442695
  %v1943 = vpow.pop %v1942
  %v1944 = vmul.f32 %v1938, 1.442695
  %v1945 = vpow.pop %v1944
  %v1946 = vmul.f32 %v1939, 1.442695
  %v1947 = vpow.pop %v1946
  %v1948 = vadd.f32 %v1941, 1.0
  %v1949 = vadd.f32 %v1943, 1.0
  %v1950 = vadd.f32 %v1945, 1.0
  %v1951 = vadd.f32 %v1947, 1.0
  %v1952 = vrcp.pop %v1948
  %v1953 = vmul.f32 1.0, %v1952
  %v1954 = vrcp.pop %v1949
  %v1955 = vmul.f32 1.0, %v1954
  %v1956 = vrcp.pop %v1950
  %v1957 = vmul.f32 1.0, %v1956
  %v1958 = vrcp.pop %v1951
  %v1959 = vmul.f32 1.0, %v1958
  %v1960 = vtanh.pop %v1918
  %v1961 = vtanh.pop %v1923
  %v1962 = vtanh.pop %v1928
  %v1963 = vtanh.pop %v1933
  %1968 = vrot.lane.b32.xlu0 %v1960, 96
  %v1969 = vpop.permute.xlu0 %1968
  %1970 = vrot.lane.b32.xlu0 %v1961, 96
  %v1971 = vpop.permute.xlu0 %1970
  %1972 = vrot.lane.b32.xlu0 %v1962, 96
  %v1973 = vpop.permute.xlu0 %1972
  %1974 = vrot.lane.b32.xlu0 %v1963, 96
  %v1975 = vpop.permute.xlu0 %1974
  %v1980 = vmul.f32 %v1953, %v1969
  %v1981 = vmul.f32 %v1955, %v1971
  %v1982 = vmul.f32 %v1957, %v1973
  %v1983 = vmul.f32 %v1959, %v1975
  %v1984 = vld [vmem:[%s5 + $0x18] sm:$0xff]
  %v1985 = vld [vmem:[%s5 + $0x48] sm:$0xff]
  %v1986 = vld [vmem:[%s5 + $0x78] sm:$0xff]
  %v1987 = vld [vmem:[%s5 + $0xa8] sm:$0xff]
  %v1988 = vld [vmem:[%s6 + $0xc] sm:$0x1]
  %v1990 = vlaneseq
  %v1991 = vshrl.u32 %v1990, 7
  %v1992 = vsub.s32 0, %v1991
  %v1993 = vrot.slane %v1988, %v1992
  %v1996 = vsel %vm169, %v1980, 0
  %v1999 = vsel %vm169, %v1981, 0
  %v2002 = vsel %vm169, %v1982, 0
  %v2005 = vsel %vm169, %v1983, 0
  %2007 = vmatprep.subr.mxu0 0.0
  %2008 = vmatpush1.msra.mxu0 %v1984
  %2009 = vmatprep.subr.mxu0 0.0
  %2010 = vmatpush1.msra.mxu0 %v1985
  %2011 = vmatprep.subr.mxu0 0.0
  %2012 = vmatpush1.msra.mxu0 %v1986
  %2013 = vmatprep.subr.mxu0 0.0
  %2014 = vmatpush1.msra.mxu0 %v1987
  %2015 = vmatprep.subr.mxu0 0.0
  %2016 = vmatpush1.msra.mxu0 0.0
  %2017 = vmatprep.subr.mxu0 0.0
  %2018 = vmatpush1.msra.mxu0 0.0
  %2019 = vmatprep.subr.mxu0 0.0
  %2020 = vmatpush1.msra.mxu0 0.0
  %2021 = vmatprep.subr.mxu0 0.0
  %2022 = vmatpush1.msra.mxu0 0.0
  %2023 = vmatprep.subr.mxu0 0.0
  %2024 = vmatpush1.msra.mxu0 0.0
  %2025 = vmatprep.subr.mxu0 0.0
  %2026 = vmatpush1.msra.mxu0 0.0
  %2027 = vmatprep.subr.mxu0 0.0
  %2028 = vmatpush1.msra.mxu0 0.0
  %2029 = vmatprep.subr.mxu0 0.0
  %2030 = vmatpush1.msra.mxu0 0.0
  %2031 = vmatprep.subr.mxu0 0.0
  %2032 = vmatpush1.msra.mxu0 0.0
  %2033 = vmatprep.subr.mxu0 0.0
  %2034 = vmatpush1.msra.mxu0 0.0
  %2035 = vmatprep.subr.mxu0 0.0
  %2036 = vmatpush1.msra.mxu0 0.0
  %2037 = vmatprep.subr.mxu0 0.0
  %2038 = vmatpush1.msra.mxu0 0.0
  %2039 = vmatprep.subr.mxu0 0.0
  %2040 = vmatpush1.msra.mxu0 0.0
  %2041 = vmatprep.subr.mxu0 0.0
  %2042 = vmatpush1.msra.mxu0 0.0
  %2043 = vmatprep.subr.mxu0 0.0
  %2044 = vmatpush1.msra.mxu0 0.0
  %2045 = vmatprep.subr.mxu0 0.0
  %2046 = vmatpush1.msra.mxu0 0.0
  %2047 = vmatprep.subr.mxu0 0.0
  %2048 = vmatpush1.msra.mxu0 0.0
  %2049 = vmatprep.subr.mxu0 0.0
  %2050 = vmatpush1.msra.mxu0 0.0
  %2051 = vmatprep.subr.mxu0 0.0
  %2052 = vmatpush1.msra.mxu0 0.0
  %2053 = vmatprep.subr.mxu0 0.0
  %2054 = vmatpush1.msra.mxu0 0.0
  %2055 = vmatprep.subr.mxu0 0.0
  %2056 = vmatpush1.msra.mxu0 0.0
  %2057 = vmatprep.subr.mxu0 0.0
  %2058 = vmatpush1.msra.mxu0 0.0
  %2059 = vmatprep.subr.mxu0 0.0
  %2060 = vmatpush1.msra.mxu0 0.0
  %2061 = vmatprep.subr.mxu0 0.0
  %2062 = vmatpush1.msra.mxu0 0.0
  %2063 = vmatprep.subr.mxu0 0.0
  %2064 = vmatpush1.msra.mxu0 0.0
  %2065 = vmatprep.subr.mxu0 0.0
  %2066 = vmatpush1.msra.mxu0 0.0
  %2067 = vmatprep.subr.mxu0 0.0
  %2068 = vmatpush1.msra.mxu0 0.0
  %2069 = vmatprep.subr.mxu0 0.0
  %2070 = vmatpush1.msra.mxu0 0.0
  %2071 = vmatprep.mubr.f32.mxu0 0.0
  %2072 = vmatmul.mubr.f32.gmra.mrb[0].mxu0 %v1996
  %v2073 = vpop.f32.mrb[0].mxu0
  %v2074 = vadd.f32 %v1993, %v2073
  %v2075 = vpop.f32.mrb[0].mxu0
  %2076 = vmatprep.mubr.f32.mxu0 0.0
  %2077 = vmatmul.mubr.f32.gmra.mrb[0].mxu0 %v1999
  %v2078 = vpop.f32.mrb[0].mxu0
  %v2079 = vadd.f32 %v1993, %v2078
  %v2080 = vpop.f32.mrb[0].mxu0
  %2081 = vmatprep.mubr.f32.mxu0 0.0
  %2082 = vmatmul.mubr.f32.gmra.mrb[0].mxu0 %v2002
  %v2083 = vpop.f32.mrb[0].mxu0
  %v2084 = vadd.f32 %v1993, %v2083
  %v2085 = vpop.f32.mrb[0].mxu0
  %2086 = vmatprep.mubr.f32.mxu0 0.0
  %2087 = vmatmul.mubr.f32.gmra.mrb[0].mxu0 %v2005
  %v2088 = vpop.f32.mrb[0].mxu0
  %v2089 = vadd.f32 %v1993, %v2088
  %v2090 = vpop.f32.mrb[0].mxu0
  %2091 = vdwg.mxu0
  %v2092 = vadd.f32 %v1736, %v2074
  %v2093 = vadd.f32 %v1737, %v2079
  %v2094 = vadd.f32 %v1738, %v2084
  %v2095 = vadd.f32 %v1739, %v2089
  %v2096 = vrcp.pop 2.0
  %v2097 = vmul.f32 %v2092, %v2096
  %v2098 = vmul.f32 %v2093, %v2096
  %v2099 = vmul.f32 %v2094, %v2096
  %v2100 = vmul.f32 %v2095, %v2096
  %v2101 = vld [vmem:[%s5 + $0x20] sm:$0xff]
  %v2102 = vld [vmem:[%s5 + $0x50] sm:$0xff]
  %v2103 = vld [vmem:[%s5 + $0x80] sm:$0xff]
  %v2104 = vld [vmem:[%s5 + $0xb0] sm:$0xff]
  %v2105 = vld [vmem:[%s6 + $0xd] sm:$0x1]
  %v2107 = vlaneseq
  %v2108 = vshrl.u32 %v2107, 7
  %v2109 = vsub.s32 0, %v2108
  %v2110 = vrot.slane %v2105, %v2109
  %2116 = vrot.lane.b32.xlu0 %v2097, 96
  %v2117 = vpop.permute.xlu0 %2116
  %2118 = vrot.lane.b32.xlu0 %v2098, 96
  %v2119 = vpop.permute.xlu0 %2118
  %2120 = vrot.lane.b32.xlu0 %v2099, 96
  %v2121 = vpop.permute.xlu0 %2120
  %2122 = vrot.lane.b32.xlu0 %v2100, 96
  %v2123 = vpop.permute.xlu0 %2122
  %v2124 = vsel %vm169, %v2117, 0
  %v2126 = vsel %vm169, %v2119, 0
  %v2128 = vsel %vm169, %v2121, 0
  %v2130 = vsel %vm169, %v2123, 0
  %2132 = vmatprep.subr.mxu0 0.0
  %2133 = vmatpush1.msra.mxu0 %v2101
  %2134 = vmatprep.subr.mxu0 0.0
  %2135 = vmatpush1.msra.mxu0 %v2102
  %2136 = vmatprep.subr.mxu0 0.0
  %2137 = vmatpush1.msra.mxu0 %v2103
  %2138 = vmatprep.subr.mxu0 0.0
  %2139 = vmatpush1.msra.mxu0 %v2104
  %2140 = vmatprep.subr.mxu0 0.0
  %2141 = vmatpush1.msra.mxu0 0.0
  %2142 = vmatprep.subr.mxu0 0.0
  %2143 = vmatpush1.msra.mxu0 0.0
  %2144 = vmatprep.subr.mxu0 0.0
  %2145 = vmatpush1.msra.mxu0 0.0
  %2146 = vmatprep.subr.mxu0 0.0
  %2147 = vmatpush1.msra.mxu0 0.0
  %2148 = vmatprep.subr.mxu0 0.0
  %2149 = vmatpush1.msra.mxu0 0.0
  %2150 = vmatprep.subr.mxu0 0.0
  %2151 = vmatpush1.msra.mxu0 0.0
  %2152 = vmatprep.subr.mxu0 0.0
  %2153 = vmatpush1.msra.mxu0 0.0
  %2154 = vmatprep.subr.mxu0 0.0
  %2155 = vmatpush1.msra.mxu0 0.0
  %2156 = vmatprep.subr.mxu0 0.0
  %2157 = vmatpush1.msra.mxu0 0.0
  %2158 = vmatprep.subr.mxu0 0.0
  %2159 = vmatpush1.msra.mxu0 0.0
  %2160 = vmatprep.subr.mxu0 0.0
  %2161 = vmatpush1.msra.mxu0 0.0
  %2162 = vmatprep.subr.mxu0 0.0
  %2163 = vmatpush1.msra.mxu0 0.0
  %2164 = vmatprep.subr.mxu0 0.0
  %2165 = vmatpush1.msra.mxu0 0.0
  %2166 = vmatprep.subr.mxu0 0.0
  %2167 = vmatpush1.msra.mxu0 0.0
  %2168 = vmatprep.subr.mxu0 0.0
  %2169 = vmatpush1.msra.mxu0 0.0
  %2170 = vmatprep.subr.mxu0 0.0
  %2171 = vmatpush1.msra.mxu0 0.0
  %2172 = vmatprep.subr.mxu0 0.0
  %2173 = vmatpush1.msra.mxu0 0.0
  %2174 = vmatprep.subr.mxu0 0.0
  %2175 = vmatpush1.msra.mxu0 0.0
  %2176 = vmatprep.subr.mxu0 0.0
  %2177 = vmatpush1.msra.mxu0 0.0
  %2178 = vmatprep.subr.mxu0 0.0
  %2179 = vmatpush1.msra.mxu0 0.0
  %2180 = vmatprep.subr.mxu0 0.0
  %2181 = vmatpush1.msra.mxu0 0.0
  %2182 = vmatprep.subr.mxu0 0.0
  %2183 = vmatpush1.msra.mxu0 0.0
  %2184 = vmatprep.subr.mxu0 0.0
  %2185 = vmatpush1.msra.mxu0 0.0
  %2186 = vmatprep.subr.mxu0 0.0
  %2187 = vmatpush1.msra.mxu0 0.0
  %2188 = vmatprep.subr.mxu0 0.0
  %2189 = vmatpush1.msra.mxu0 0.0
  %2190 = vmatprep.subr.mxu0 0.0
  %2191 = vmatpush1.msra.mxu0 0.0
  %2192 = vmatprep.subr.mxu0 0.0
  %2193 = vmatpush1.msra.mxu0 0.0
  %2194 = vmatprep.subr.mxu0 0.0
  %2195 = vmatpush1.msra.mxu0 0.0
  %2196 = vmatprep.mubr.f32.mxu0 0.0
  %2197 = vmatmul.mubr.f32.gmra.mrb[0].mxu0 %v2124
  %v2198 = vpop.f32.mrb[0].mxu0
  %v2199 = vadd.f32 %v2110, %v2198
  %v2200 = vpop.f32.mrb[0].mxu0
  %2201 = vmatprep.mubr.f32.mxu0 0.0
  %2202 = vmatmul.mubr.f32.gmra.mrb[0].mxu0 %v2126
  %v2203 = vpop.f32.mrb[0].mxu0
  %v2204 = vadd.f32 %v2110, %v2203
  %v2205 = vpop.f32.mrb[0].mxu0
  %2206 = vmatprep.mubr.f32.mxu0 0.0
  %2207 = vmatmul.mubr.f32.gmra.mrb[0].mxu0 %v2128
  %v2208 = vpop.f32.mrb[0].mxu0
  %v2209 = vadd.f32 %v2110, %v2208
  %v2210 = vpop.f32.mrb[0].mxu0
  %2211 = vmatprep.mubr.f32.mxu0 0.0
  %2212 = vmatmul.mubr.f32.gmra.mrb[0].mxu0 %v2130
  %v2213 = vpop.f32.mrb[0].mxu0
  %v2214 = vadd.f32 %v2110, %v2213
  %v2215 = vpop.f32.mrb[0].mxu0
  %2216 = vdwg.mxu0
  %v2217 = vmax.f32 %v2199, 0.0
  %v2218 = vmax.f32 %v2204, 0.0
  %v2219 = vmax.f32 %v2209, 0.0
  %v2220 = vmax.f32 %v2214, 0.0
  %v2221 = vld [vmem:[%s5 + $0x28] sm:$0xff]
  %v2222 = vld [vmem:[%s5 + $0x58] sm:$0xff]
  %v2223 = vld [vmem:[%s5 + $0x88] sm:$0xff]
  %v2224 = vld [vmem:[%s5 + $0xb8] sm:$0xff]
  %v2225 = vld [vmem:[%s6 + $0xe] sm:$0x1]
  %v2227 = vlaneseq
  %v2228 = vshrl.u32 %v2227, 7
  %v2229 = vsub.s32 0, %v2228
  %v2230 = vrot.slane %v2225, %v2229
  %v2233 = vsel %vm169, %v2217, 0
  %v2236 = vsel %vm169, %v2218, 0
  %v2239 = vsel %vm169, %v2219, 0
  %v2242 = vsel %vm169, %v2220, 0
  %2244 = vmatprep.subr.mxu0 0.0
  %2245 = vmatpush1.msra.mxu0 %v2221
  %2246 = vmatprep.subr.mxu0 0.0
  %2247 = vmatpush1.msra.mxu0 %v2222
  %2248 = vmatprep.subr.mxu0 0.0
  %2249 = vmatpush1.msra.mxu0 %v2223
  %2250 = vmatprep.subr.mxu0 0.0
  %2251 = vmatpush1.msra.mxu0 %v2224
  %2252 = vmatprep.subr.mxu0 0.0
  %2253 = vmatpush1.msra.mxu0 0.0
  %2254 = vmatprep.subr.mxu0 0.0
  %2255 = vmatpush1.msra.mxu0 0.0
  %2256 = vmatprep.subr.mxu0 0.0
  %2257 = vmatpush1.msra.mxu0 0.0
  %2258 = vmatprep.subr.mxu0 0.0
  %2259 = vmatpush1.msra.mxu0 0.0
  %2260 = vmatprep.subr.mxu0 0.0
  %2261 = vmatpush1.msra.mxu0 0.0
  %2262 = vmatprep.subr.mxu0 0.0
  %2263 = vmatpush1.msra.mxu0 0.0
  %2264 = vmatprep.subr.mxu0 0.0
  %2265 = vmatpush1.msra.mxu0 0.0
  %2266 = vmatprep.subr.mxu0 0.0
  %2267 = vmatpush1.msra.mxu0 0.0
  %2268 = vmatprep.subr.mxu0 0.0
  %2269 = vmatpush1.msra.mxu0 0.0
  %2270 = vmatprep.subr.mxu0 0.0
  %2271 = vmatpush1.msra.mxu0 0.0
  %2272 = vmatprep.subr.mxu0 0.0
  %2273 = vmatpush1.msra.mxu0 0.0
  %2274 = vmatprep.subr.mxu0 0.0
  %2275 = vmatpush1.msra.mxu0 0.0
  %2276 = vmatprep.subr.mxu0 0.0
  %2277 = vmatpush1.msra.mxu0 0.0
  %2278 = vmatprep.subr.mxu0 0.0
  %2279 = vmatpush1.msra.mxu0 0.0
  %2280 = vmatprep.subr.mxu0 0.0
  %2281 = vmatpush1.msra.mxu0 0.0
  %2282 = vmatprep.subr.mxu0 0.0
  %2283 = vmatpush1.msra.mxu0 0.0
  %2284 = vmatprep.subr.mxu0 0.0
  %2285 = vmatpush1.msra.mxu0 0.0
  %2286 = vmatprep.subr.mxu0 0.0
  %2287 = vmatpush1.msra.mxu0 0.0
  %2288 = vmatprep.subr.mxu0 0.0
  %2289 = vmatpush1.msra.mxu0 0.0
  %2290 = vmatprep.subr.mxu0 0.0
  %2291 = vmatpush1.msra.mxu0 0.0
  %2292 = vmatprep.subr.mxu0 0.0
  %2293 = vmatpush1.msra.mxu0 0.0
  %2294 = vmatprep.subr.mxu0 0.0
  %2295 = vmatpush1.msra.mxu0 0.0
  %2296 = vmatprep.subr.mxu0 0.0
  %2297 = vmatpush1.msra.mxu0 0.0
  %2298 = vmatprep.subr.mxu0 0.0
  %2299 = vmatpush1.msra.mxu0 0.0
  %2300 = vmatprep.subr.mxu0 0.0
  %2301 = vmatpush1.msra.mxu0 0.0
  %2302 = vmatprep.subr.mxu0 0.0
  %2303 = vmatpush1.msra.mxu0 0.0
  %2304 = vmatprep.subr.mxu0 0.0
  %2305 = vmatpush1.msra.mxu0 0.0
  %2306 = vmatprep.subr.mxu0 0.0
  %2307 = vmatpush1.msra.mxu0 0.0
  %2308 = vmatprep.mubr.f32.mxu0 0.0
  %2309 = vmatmul.mubr.f32.gmra.mrb[0].mxu0 %v2233
  %v2310 = vpop.f32.mrb[0].mxu0
  %v2311 = vadd.f32 %v2230, %v2310
  %v2312 = vpop.f32.mrb[0].mxu0
  %2313 = vmatprep.mubr.f32.mxu0 0.0
  %2314 = vmatmul.mubr.f32.gmra.mrb[0].mxu0 %v2236
  %v2315 = vpop.f32.mrb[0].mxu0
  %v2316 = vadd.f32 %v2230, %v2315
  %v2317 = vpop.f32.mrb[0].mxu0
  %2318 = vmatprep.mubr.f32.mxu0 0.0
  %2319 = vmatmul.mubr.f32.gmra.mrb[0].mxu0 %v2239
  %v2320 = vpop.f32.mrb[0].mxu0
  %v2321 = vadd.f32 %v2230, %v2320
  %v2322 = vpop.f32.mrb[0].mxu0
  %2323 = vmatprep.mubr.f32.mxu0 0.0
  %2324 = vmatmul.mubr.f32.gmra.mrb[0].mxu0 %v2242
  %v2325 = vpop.f32.mrb[0].mxu0
  %v2326 = vadd.f32 %v2230, %v2325
  %v2327 = vpop.f32.mrb[0].mxu0
  %2328 = vdwg.mxu0
  %2329 = vst [vmem:[%s7] sm:$0xff] %v2311
  %2330 = vst [vmem:[%s7 + $0x8] sm:$0xff] %v2316
  %2331 = vst [vmem:[%s7 + $0x10] sm:$0xff] %v2321
  %2332 = vst [vmem:[%s7 + $0x18] sm:$0xff] %v2326
  // Predicated region
  $region30: #{denoiser_forward.1} parent=0 // pred_check
    _
  $region31: #{denoiser_forward.1} parent=0 // pred_check_branch
    %2334 = sbr.rel (0) target = $region33
  $region32: #{denoiser_forward.1} parent=0 // pred_region
    _
  $region33: #{denoiser_forward.1} parent=0 // pred_fallthru
    _
  // Predicated region
  $region34: #{denoiser_forward.1} parent=0 // pred_check
    _
  $region35: #{denoiser_forward.1} parent=0 // pred_check_branch
    %2336 = sbr.rel (0) target = $region37
  $region36: #{denoiser_forward.1} parent=0 // pred_region
    _
  $region37: #{denoiser_forward.1} parent=0 // pred_fallthru
    _

</llo_original>
